<compile_context>
chip_gen: v7x
topology: tpu7x:2x2x1
jax: 0.10.0
libtpu: 0.0.40
codegen_flags: <defaults>
</compile_context>

<pallas_src>
import math

import jax
import jax.numpy as jnp
from jax.experimental import pallas as pl
from jax.experimental.pallas import tpu as pltpu


# ---------------------------------------------------------------------------
# Pallas kernel: k-hot(idx) @ block-diagonal table  ->  packed embeddings
# ---------------------------------------------------------------------------
def _fixed_embedding_kernel(idx_ref, table_ref, out_ref):
    # idx_ref:   (rows, k)                int32   k token indices per output row
    # table_ref: (k*c_in_pad, k*d_model)  float32 block-diagonal replicated table
    # out_ref:   (rows, k*d_model)
    idx = idx_ref[...]                                    # (rows, k) int32
    rows, k = idx.shape
    c_in_pad = table_ref.shape[0] // k

    # One iota, reused for all k sub-blocks (hoisted out of the per-j loop).
    col = jax.lax.broadcasted_iota(jnp.int32, (rows, c_in_pad), 1)

    # Per-token one-hot slabs, concatenated along lanes into the k-hot LHS.
    # Total compare count == one compare per token per c_in_pad lane (same as
    # the unpacked formulation); the compute slot stays slack vs HBM writeback.
    parts = [(col == idx[:, j:j + 1]).astype(table_ref.dtype) for j in range(k)]
    khot = parts[0] if k == 1 else jnp.concatenate(parts, axis=1)  # (rows, k*c_in_pad)

    # Exactly one 1.0 per c_in_pad-wide sub-block -> exact row copy on the MXU.
    out = jnp.dot(khot, table_ref[...],
                  preferred_element_type=jnp.float32,
                  precision=jax.lax.Precision.HIGHEST)    # (rows, k*d_model)
    out_ref[...] = out.astype(out_ref.dtype)


# ---------------------------------------------------------------------------
# Helpers
# ---------------------------------------------------------------------------
def _round_up(n, m):
    return ((n + m - 1) // m) * m


# ---------------------------------------------------------------------------
# Python wrapper mirroring the nn.Module
# ---------------------------------------------------------------------------
class FixedEmbedding:
    """JAX/Pallas port of the PyTorch FixedEmbedding module."""

    # Below this output size, a standalone Pallas call costs more than the
    # gather itself; use a fusable jnp.take instead.
    _FAST_PATH_BYTES = 1 << 20

    def __init__(self, c_in, d_model, out_dtype=jnp.float32):
        assert d_model % 2 == 0, "d_model must be even (as in the reference)"
        self.c_in = c_in
        self.d_model = d_model
        # Keep f32 by default to match the PyTorch reference bit-for-bit.
        # Pass out_dtype=jnp.bfloat16 to halve HBM writeback if downstream
        # (e.g. a bf16 TimeLLM backbone) tolerates the rounding.
        self.out_dtype = out_dtype

        # Fixed sinusoidal table, identical construction to the PyTorch module.
        position = jnp.arange(c_in, dtype=jnp.float32)[:, None]         # (c_in, 1)
        div_term = jnp.exp(
            jnp.arange(0, d_model, 2, dtype=jnp.float32)
            * -(math.log(10000.0) / d_model))                           # (d_model//2,)
        angles = position * div_term                                     # (c_in, d_model//2)
        w = jnp.zeros((c_in, d_model), jnp.float32)
        w = w.at[:, 0::2].set(jnp.sin(angles))
        w = w.at[:, 1::2].set(jnp.cos(angles))
        self.weight = w                                                  # (c_in, d_model)

        # Lane-packing factor: pack k tokens per 128-lane output row.
        if d_model < 128 and 128 % d_model == 0:
            k = 128 // d_model
        else:
            k = 1
        self._k = k

        # Pad rows to the 128-lane width so the one-hot compare / MXU
        # contraction dim is unmasked.  Padded rows are zero and unreachable
        # for valid indices.
        c_in_pad = _round_up(c_in, 128)
        self._c_in_pad = c_in_pad
        w_pad = jnp.pad(w, ((0, c_in_pad - c_in), (0, 0)))               # (c_in_pad, d_model)

        # Block-diagonal replicated table: (k*c_in_pad, k*d_model).
        tbl = jnp.zeros((k * c_in_pad, k * d_model), jnp.float32)
        for j in range(k):
            tbl = tbl.at[j * c_in_pad:(j + 1) * c_in_pad,
                         j * d_model:(j + 1) * d_model].set(w_pad)
        self._table_packed = tbl

    # -- tile sizing -------------------------------------------------------
    def _choose_block_tokens(self, n_tokens):
        k, d_model = self._k, self.d_model
        quantum = 8 * k                              # output rows must be a multiple of 8
        bytes_per_tok = 4 * d_model
        # ~4 MiB f32 output tiles: ~86% of HBM roofline, fewer grid steps.
        target = max(quantum, ((4 << 20) // bytes_per_tok) // quantum * quantum)
        # Prefer >= 2 grid blocks so ("parallel",) spreads work across both
        # TensorCores on v7x.
        half = _round_up(pl.cdiv(max(n_tokens, 1), 2), quantum)
        return max(quantum, min(target, half))

    # -- forward -----------------------------------------------------------
    def __call__(self, x, force_pallas=False):
        # x: integer indices of arbitrary shape; output: x.shape + (d_model,)
        orig_shape = x.shape
        idx = x.reshape(-1).astype(jnp.int32)
        n = idx.shape[0]
        d_model, k = self.d_model, self._k

        # Small-problem fast path (fusable, no custom-call launch overhead).
        if (not force_pallas) and n * d_model * 4 < self._FAST_PATH_BYTES:
            out = jnp.take(self.weight, idx, axis=0).astype(self.out_dtype)
            return out.reshape(*orig_shape, d_model)

        bt = self._choose_block_tokens(n)            # tokens per grid block (mult of 8k)
        n_pad = _round_up(n, bt)
        if n_pad != n:
            idx = jnp.pad(idx, (0, n_pad - n))       # pad with valid index 0
        rows = n_pad // k
        bt_rows = bt // k
        idx2d = idx.reshape(rows, k)                 # k packed tokens per row
        d_out = k * d_model                          # 128 when packing

        grid = (rows // bt_rows,)
        c_in_pad = self._c_in_pad
        out = pl.pallas_call(
            _fixed_embedding_kernel,
            out_shape=jax.ShapeDtypeStruct((rows, d_out), self.out_dtype),
            grid_spec=pltpu.PrefetchScalarGridSpec(
                num_scalar_prefetch=0,
                grid=grid,
                in_specs=[
                    # token-index block (last dim k == full extent)
                    pl.BlockSpec((bt_rows, k), lambda i: (i, 0)),
                    # full table, constant block index -> resident in VMEM
                    pl.BlockSpec((k * c_in_pad, d_out), lambda i: (0, 0)),
                ],
                # lane-dense output: last dim is 128 (packed) -> unmasked stores
                out_specs=pl.BlockSpec((bt_rows, d_out), lambda i: (i, 0)),
            ),
            compiler_params=pltpu.CompilerParams(
                dimension_semantics=("parallel",),
                vmem_limit_bytes=32 << 20),
        )(idx2d, self._table_packed)

        # (rows, k*d_model) rows hold k consecutive tokens -> plain reshape.
        out = out.reshape(n_pad, d_model)[:n]
        return out.reshape(*orig_shape, d_model)


# ---------------------------------------------------------------------------
# Self-test
# ---------------------------------------------------------------------------
if __name__ == "__main__":
    key = jax.random.PRNGKey(0)
    c_in, d_model = 24, 32            # e.g. hour-of-day temporal embedding
    B, T = 2, 8
    x = jax.random.randint(key, (B, T), 0, c_in, dtype=jnp.int32)

    emb = FixedEmbedding(c_in, d_model)

    # Pure-JAX reference: plain table gather (== nn.Embedding with fixed weight).
    y_ref = jnp.take(emb.weight, x.reshape(-1), axis=0).reshape(B, T, d_model)

    # 1) Pallas path (forced: at these tiny shapes the default would take the
    #    fused jnp.take fast path instead of launching the kernel).
    y = jax.block_until_ready(emb(x, force_pallas=True))
    assert y.shape == (B, T, d_model)
    assert jnp.allclose(y, y_ref, atol=1e-5, rtol=1e-5), "pallas path mismatch"

    # 2) Non-multiple-of-block token count exercises the pad/slice path.
    x2 = jax.random.randint(jax.random.PRNGKey(1), (3, 5), 0, c_in, dtype=jnp.int32)
    y2 = jax.block_until_ready(emb(x2, force_pallas=True))
    y2_ref = jnp.take(emb.weight, x2.reshape(-1), axis=0).reshape(3, 5, d_model)
    assert jnp.allclose(y2, y2_ref, atol=1e-5, rtol=1e-5), "padded-path mismatch"

    # 3) Small-problem fast path (no Pallas launch).
    y3 = jax.block_until_ready(emb(x))
    assert jnp.allclose(y3, y_ref, atol=1e-6, rtol=1e-6), "fast-path mismatch"

    print("KERNEL_OK")
</pallas_src>

<mosaic_0001>
module attributes {stable_mosaic.version = 11 : i64} {
  func.func @_fixed_embedding_kernel(%arg0: i32, %arg1: memref<8x4xi32, #tpu.memory_space<vmem>>, %arg2: memref<512x128xf32, #tpu.memory_space<vmem>>, %arg3: memref<8x128xf32, #tpu.memory_space<vmem>>) attributes {dimension_semantics = [#tpu.dimension_semantics<parallel>], iteration_bounds = array<i64: 1>, scalar_prefetch = 0 : i64, scratch_operands = 0 : i64, tpu.core_type = #tpu.core_type<tc>, window_params = [{transform_indices = @transform_0, window_bounds = array<i64: 8, 4>}, {pipeline_mode = #tpu.pipeline_mode<synchronous>, transform_indices = @transform_1, window_bounds = array<i64: 512, 128>}, {transform_indices = @transform_2, window_bounds = array<i64: 8, 128>}]} {
    %c0 = arith.constant 0 : index
    %c0_0 = arith.constant 0 : index
    %0 = vector.load %arg1[%c0, %c0_0] : memref<8x4xi32, #tpu.memory_space<vmem>>, vector<8x4xi32>
    %1 = tpu.iota {dimensions = array<i32: 1>} : vector<8x128xi32>
    %2 = vector.extract_strided_slice %0 {offsets = [0, 0], sizes = [8, 1], strides = [1, 1]} : vector<8x4xi32> to vector<8x1xi32>
    %3 = vector.broadcast %2 : vector<8x1xi32> to vector<8x128xi32>
    %4 = arith.cmpi eq, %1, %3 : vector<8x128xi32>
    %5 = arith.extui %4 : vector<8x128xi1> to vector<8x128xi32>
    %6 = arith.sitofp %5 : vector<8x128xi32> to vector<8x128xf32>
    %7 = vector.extract_strided_slice %0 {offsets = [0, 1], sizes = [8, 1], strides = [1, 1]} : vector<8x4xi32> to vector<8x1xi32>
    %8 = vector.broadcast %7 : vector<8x1xi32> to vector<8x128xi32>
    %9 = arith.cmpi eq, %1, %8 : vector<8x128xi32>
    %10 = arith.extui %9 : vector<8x128xi1> to vector<8x128xi32>
    %11 = arith.sitofp %10 : vector<8x128xi32> to vector<8x128xf32>
    %12 = vector.extract_strided_slice %0 {offsets = [0, 2], sizes = [8, 1], strides = [1, 1]} : vector<8x4xi32> to vector<8x1xi32>
    %13 = vector.broadcast %12 : vector<8x1xi32> to vector<8x128xi32>
    %14 = arith.cmpi eq, %1, %13 : vector<8x128xi32>
    %15 = arith.extui %14 : vector<8x128xi1> to vector<8x128xi32>
    %16 = arith.sitofp %15 : vector<8x128xi32> to vector<8x128xf32>
    %17 = vector.extract_strided_slice %0 {offsets = [0, 3], sizes = [8, 1], strides = [1, 1]} : vector<8x4xi32> to vector<8x1xi32>
    %18 = vector.broadcast %17 : vector<8x1xi32> to vector<8x128xi32>
    %19 = arith.cmpi eq, %1, %18 : vector<8x128xi32>
    %20 = arith.extui %19 : vector<8x128xi1> to vector<8x128xi32>
    %21 = arith.sitofp %20 : vector<8x128xi32> to vector<8x128xf32>
    %22 = tpu.concatenate %6, %11, %16, %21 in 1 : vector<8x128xf32>, vector<8x128xf32>, vector<8x128xf32>, vector<8x128xf32> -> vector<8x512xf32>
    %c0_1 = arith.constant 0 : index
    %c0_2 = arith.constant 0 : index
    %23 = vector.load %arg2[%c0_1, %c0_2] : memref<512x128xf32, #tpu.memory_space<vmem>>, vector<512x128xf32>
    %cst = arith.constant dense<0.000000e+00> : vector<8x128xf32>
    %24 = tpu.matmul %22, %23, %cst {dimension_numbers = #tpu.dot_dimension_numbers<[1], [0], [0], [1], [0, 0, 1, 1], [], []>, precision = #tpu.contract_precision<fp32>} : vector<8x512xf32>, vector<512x128xf32>, vector<8x128xf32> -> vector<8x128xf32>
    %c0_3 = arith.constant 0 : index
    %c0_4 = arith.constant 0 : index
    %25 = vector.load %arg3[%c0_3, %c0_4] : memref<8x128xf32, #tpu.memory_space<vmem>>, vector<8x128xf32>
    tpu.vector_store %arg3[%c0_3, %c0_4], %24 {strides = array<i32>} : memref<8x128xf32, #tpu.memory_space<vmem>>, vector<8x128xf32>,
    return
  }
  func.func @transform_0(%arg0: i32) -> (i32, i32) {
    %c0_i32 = arith.constant 0 : i32
    %c0_i32_0 = arith.constant 0 : i32
    return %arg0, %c0_i32 : i32, i32
  }
  func.func @transform_1(%arg0: i32) -> (i32, i32) {
    %c0_i32 = arith.constant 0 : i32
    %c0_i32_0 = arith.constant 0 : i32
    %c0_i32_1 = arith.constant 0 : i32
    return %c0_i32, %c0_i32_0 : i32, i32
  }
  func.func @transform_2(%arg0: i32) -> (i32, i32) {
    %c0_i32 = arith.constant 0 : i32
    %c0_i32_0 = arith.constant 0 : i32
    return %arg0, %c0_i32 : i32, i32
  }
}

</mosaic_0001>

<llo_original>
// kernel: tpu_custom_call.1
$region0: #{tpu_custom_call.1}
  #allocation0 [shape = 'u32[]', space=smem, size = 0x4, offset = 0x4, fixed_abs, tag = 'smem constant byte address 0x4 - core index']
  #allocation1 [shape = 'u32[144,128]{1,0:T(1,128)}', space=vmem, size = 0x12000, scoped, tag = 'internal scratch']
  %s0 = inlined_call_operand.vmem [shape: s32[8,4], index: 0, kind: input, shape index: {}]
  %s1 = inlined_call_operand.hbm [shape: f32[512,128], index: 1, kind: input, shape index: {}]
  %s2 = inlined_call_operand.hbm [shape: f32[8,128], index: 2, kind: output, shape index: {}]
  %s3 = sld [smem:[#allocation0]]
  $region22: #{tpu_custom_call.1} parent=0
    _
  %s5 = ssub.s32 1, %s3
  %s6 = scalar_select 0, %s5, %s3
  $region1: #{tpu_custom_call.1} parent=0
    #allocation2 [shape = 'u8[262144]{0}', space=vmem, size = 0x40000, scoped, tag = 'input window, operand 1, single buffered']
    #allocation3 [shape = 's32[1]{0}', space=sflag, size = 0x4, scoped, tag = 'scoped memory for tpu_custom_call.1']
    #allocation4 [shape = 's32[1]{0}', space=sflag, size = 0x4, scoped, tag = 'scoped memory for tpu_custom_call.1']
    #allocation5 [shape = 'u8[4096]{0}', space=vmem, size = 0x1000, scoped, tag = 'output window, operand 0, single buffered']
    %7 = vsyncpa [#allocation3], 0
    %8 = vsyncpa [#allocation4], 0
    // Predicated region
    $region2: #{tpu_custom_call.1} parent=1 // pred_check
      _
    $region3: #{tpu_custom_call.1} parent=1 // pred_check_branch
      %10 = sbr.rel (0) target = $region5
    $region4: #{tpu_custom_call.1} parent=1 // pred_region
      _
    $region5: #{tpu_custom_call.1} parent=1 // pred_fallthru
      _
    // Predicated region
    $region6: #{tpu_custom_call.1} parent=1 // pred_check
      _
    $region7: #{tpu_custom_call.1} parent=1 // pred_check_branch
      %12 = sbr.rel (0) target = $region9
    $region8: #{tpu_custom_call.1} parent=1 // pred_region
      %s14 = ssub.s32 8192, 8192
      %15 = vsyncadd [#allocation3], %s14
      %s16 = sshll.u32 [#allocation2], 4
      %s17 = int_to_ptr.vmem [resolvable:$true] %s16
      %22 = dma.hbm_to_vmem [thread:$0]  %s1, 8192, %s17, [#allocation3], 128, 128, 8
    $region9: #{tpu_custom_call.1} parent=1 // pred_fallthru
      _
    // Predicated region
    $region10: #{tpu_custom_call.1} parent=1 // pred_check
      _
    $region11: #{tpu_custom_call.1} parent=1 // pred_check_branch
      %24 = sbr.rel (0) target = $region13
    $region12: #{tpu_custom_call.1} parent=1 // pred_region
      %25 = dma.done [#allocation3], 8192
    $region13: #{tpu_custom_call.1} parent=1 // pred_fallthru
      _
    %v26 = vld [vmem:[%s0] sm:$0xff]
    %v27 = vlaneseq
    %v28 = vand.u32 %v27, 127
    %29 = vset.pattern.permute.xlu0 0
    %30 = vperm.xlu0 %29, %v26
    %v31 = vpop.permute.xlu0 %30
    %vm32 = vcmp.eq.s32.totalorder %v28, %v31
    %v33 = vsel %vm32, 1, 0
    %v34 = vcvt.s32.f32 %v33
    %35 = vset.pattern.permute.xlu0 1
    %36 = vperm.xlu0 %35, %v26
    %v37 = vpop.permute.xlu0 %36
    %vm38 = vcmp.eq.s32.totalorder %v28, %v37
    %v39 = vsel %vm38, 1, 0
    %v40 = vcvt.s32.f32 %v39
    %41 = vset.pattern.permute.xlu0 2
    %42 = vperm.xlu0 %41, %v26
    %v43 = vpop.permute.xlu0 %42
    %vm44 = vcmp.eq.s32.totalorder %v28, %v43
    %v45 = vsel %vm44, 1, 0
    %v46 = vcvt.s32.f32 %v45
    %47 = vset.pattern.permute.xlu0 3
    %48 = vperm.xlu0 %47, %v26
    %v49 = vpop.permute.xlu0 %48
    %vm50 = vcmp.eq.s32.totalorder %v28, %v49
    %v51 = vsel %vm50, 1, 0
    %v52 = vcvt.s32.f32 %v51
    %v53 = vld [vmem:[#allocation2] sm:$0xff]
    %v54 = vld [vmem:[#allocation2 + $0x8] sm:$0xff]
    %v55 = vld [vmem:[#allocation2 + $0x10] sm:$0xff]
    %v56 = vld [vmem:[#allocation2 + $0x18] sm:$0xff]
    %v57 = vld [vmem:[#allocation2 + $0x20] sm:$0xff]
    %v58 = vld [vmem:[#allocation2 + $0x28] sm:$0xff]
    %v59 = vld [vmem:[#allocation2 + $0x30] sm:$0xff]
    %v60 = vld [vmem:[#allocation2 + $0x38] sm:$0xff]
    %v61 = vld [vmem:[#allocation2 + $0x40] sm:$0xff]
    %v62 = vld [vmem:[#allocation2 + $0x48] sm:$0xff]
    %v63 = vld [vmem:[#allocation2 + $0x50] sm:$0xff]
    %v64 = vld [vmem:[#allocation2 + $0x58] sm:$0xff]
    %v65 = vld [vmem:[#allocation2 + $0x60] sm:$0xff]
    %v66 = vld [vmem:[#allocation2 + $0x68] sm:$0xff]
    %v67 = vld [vmem:[#allocation2 + $0x70] sm:$0xff]
    %v68 = vld [vmem:[#allocation2 + $0x78] sm:$0xff]
    %v69 = vld [vmem:[#allocation2 + $0x80] sm:$0xff]
    %v70 = vld [vmem:[#allocation2 + $0x88] sm:$0xff]
    %v71 = vld [vmem:[#allocation2 + $0x90] sm:$0xff]
    %v72 = vld [vmem:[#allocation2 + $0x98] sm:$0xff]
    %v73 = vld [vmem:[#allocation2 + $0xa0] sm:$0xff]
    %v74 = vld [vmem:[#allocation2 + $0xa8] sm:$0xff]
    %v75 = vld [vmem:[#allocation2 + $0xb0] sm:$0xff]
    %v76 = vld [vmem:[#allocation2 + $0xb8] sm:$0xff]
    %v77 = vld [vmem:[#allocation2 + $0xc0] sm:$0xff]
    %v78 = vld [vmem:[#allocation2 + $0xc8] sm:$0xff]
    %v79 = vld [vmem:[#allocation2 + $0xd0] sm:$0xff]
    %v80 = vld [vmem:[#allocation2 + $0xd8] sm:$0xff]
    %v81 = vld [vmem:[#allocation2 + $0xe0] sm:$0xff]
    %v82 = vld [vmem:[#allocation2 + $0xe8] sm:$0xff]
    %v83 = vld [vmem:[#allocation2 + $0xf0] sm:$0xff]
    %v84 = vld [vmem:[#allocation2 + $0xf8] sm:$0xff]
    %v85 = vld [vmem:[#allocation2 + $0x100] sm:$0xff]
    %v86 = vld [vmem:[#allocation2 + $0x108] sm:$0xff]
    %v87 = vld [vmem:[#allocation2 + $0x110] sm:$0xff]
    %v88 = vld [vmem:[#allocation2 + $0x118] sm:$0xff]
    %v89 = vld [vmem:[#allocation2 + $0x120] sm:$0xff]
    %v90 = vld [vmem:[#allocation2 + $0x128] sm:$0xff]
    %v91 = vld [vmem:[#allocation2 + $0x130] sm:$0xff]
    %v92 = vld [vmem:[#allocation2 + $0x138] sm:$0xff]
    %v93 = vld [vmem:[#allocation2 + $0x140] sm:$0xff]
    %v94 = vld [vmem:[#allocation2 + $0x148] sm:$0xff]
    %v95 = vld [vmem:[#allocation2 + $0x150] sm:$0xff]
    %v96 = vld [vmem:[#allocation2 + $0x158] sm:$0xff]
    %v97 = vld [vmem:[#allocation2 + $0x160] sm:$0xff]
    %v98 = vld [vmem:[#allocation2 + $0x168] sm:$0xff]
    %v99 = vld [vmem:[#allocation2 + $0x170] sm:$0xff]
    %v100 = vld [vmem:[#allocation2 + $0x178] sm:$0xff]
    %v101 = vld [vmem:[#allocation2 + $0x180] sm:$0xff]
    %v102 = vld [vmem:[#allocation2 + $0x188] sm:$0xff]
    %v103 = vld [vmem:[#allocation2 + $0x190] sm:$0xff]
    %v104 = vld [vmem:[#allocation2 + $0x198] sm:$0xff]
    %v105 = vld [vmem:[#allocation2 + $0x1a0] sm:$0xff]
    %v106 = vld [vmem:[#allocation2 + $0x1a8] sm:$0xff]
    %v107 = vld [vmem:[#allocation2 + $0x1b0] sm:$0xff]
    %v108 = vld [vmem:[#allocation2 + $0x1b8] sm:$0xff]
    %v109 = vld [vmem:[#allocation2 + $0x1c0] sm:$0xff]
    %v110 = vld [vmem:[#allocation2 + $0x1c8] sm:$0xff]
    %v111 = vld [vmem:[#allocation2 + $0x1d0] sm:$0xff]
    %v112 = vld [vmem:[#allocation2 + $0x1d8] sm:$0xff]
    %v113 = vld [vmem:[#allocation2 + $0x1e0] sm:$0xff]
    %v114 = vld [vmem:[#allocation2 + $0x1e8] sm:$0xff]
    %v115 = vld [vmem:[#allocation2 + $0x1f0] sm:$0xff]
    %v116 = vld [vmem:[#allocation2 + $0x1f8] sm:$0xff]
    %117 = vmatprep.subr.mxu0 0.0
    %v118 = vand.u32 %v53, 4294901760
    %119 = vmatpush1.msra.mxu0 %v118
    %120 = vmatprep.subr.mxu0 0.0
    %v121 = vand.u32 %v54, 4294901760
    %122 = vmatpush1.msra.mxu0 %v121
    %123 = vmatprep.subr.mxu0 0.0
    %v124 = vand.u32 %v55, 4294901760
    %125 = vmatpush1.msra.mxu0 %v124
    %126 = vmatprep.subr.mxu0 0.0
    %v127 = vand.u32 %v56, 4294901760
    %128 = vmatpush1.msra.mxu0 %v127
    %129 = vmatprep.subr.mxu0 0.0
    %v130 = vand.u32 %v57, 4294901760
    %131 = vmatpush1.msra.mxu0 %v130
    %132 = vmatprep.subr.mxu0 0.0
    %v133 = vand.u32 %v58, 4294901760
    %134 = vmatpush1.msra.mxu0 %v133
    %135 = vmatprep.subr.mxu0 0.0
    %v136 = vand.u32 %v59, 4294901760
    %137 = vmatpush1.msra.mxu0 %v136
    %138 = vmatprep.subr.mxu0 0.0
    %v139 = vand.u32 %v60, 4294901760
    %140 = vmatpush1.msra.mxu0 %v139
    %141 = vmatprep.subr.mxu0 0.0
    %v142 = vand.u32 %v61, 4294901760
    %143 = vmatpush1.msra.mxu0 %v142
    %144 = vmatprep.subr.mxu0 0.0
    %v145 = vand.u32 %v62, 4294901760
    %146 = vmatpush1.msra.mxu0 %v145
    %147 = vmatprep.subr.mxu0 0.0
    %v148 = vand.u32 %v63, 4294901760
    %149 = vmatpush1.msra.mxu0 %v148
    %150 = vmatprep.subr.mxu0 0.0
    %v151 = vand.u32 %v64, 4294901760
    %152 = vmatpush1.msra.mxu0 %v151
    %153 = vmatprep.subr.mxu0 0.0
    %v154 = vand.u32 %v65, 4294901760
    %155 = vmatpush1.msra.mxu0 %v154
    %156 = vmatprep.subr.mxu0 0.0
    %v157 = vand.u32 %v66, 4294901760
    %158 = vmatpush1.msra.mxu0 %v157
    %159 = vmatprep.subr.mxu0 0.0
    %v160 = vand.u32 %v67, 4294901760
    %161 = vmatpush1.msra.mxu0 %v160
    %162 = vmatprep.subr.mxu0 0.0
    %v163 = vand.u32 %v68, 4294901760
    %164 = vmatpush1.msra.mxu0 %v163
    %165 = vmatprep.subr.mxu0 0.0
    %v166 = vand.u32 %v69, 4294901760
    %167 = vmatpush1.msra.mxu0 %v166
    %168 = vmatprep.subr.mxu0 0.0
    %v169 = vand.u32 %v70, 4294901760
    %170 = vmatpush1.msra.mxu0 %v169
    %171 = vmatprep.subr.mxu0 0.0
    %v172 = vand.u32 %v71, 4294901760
    %173 = vmatpush1.msra.mxu0 %v172
    %174 = vmatprep.subr.mxu0 0.0
    %v175 = vand.u32 %v72, 4294901760
    %176 = vmatpush1.msra.mxu0 %v175
    %177 = vmatprep.subr.mxu0 0.0
    %v178 = vand.u32 %v73, 4294901760
    %179 = vmatpush1.msra.mxu0 %v178
    %180 = vmatprep.subr.mxu0 0.0
    %v181 = vand.u32 %v74, 4294901760
    %182 = vmatpush1.msra.mxu0 %v181
    %183 = vmatprep.subr.mxu0 0.0
    %v184 = vand.u32 %v75, 4294901760
    %185 = vmatpush1.msra.mxu0 %v184
    %186 = vmatprep.subr.mxu0 0.0
    %v187 = vand.u32 %v76, 4294901760
    %188 = vmatpush1.msra.mxu0 %v187
    %189 = vmatprep.subr.mxu0 0.0
    %v190 = vand.u32 %v77, 4294901760
    %191 = vmatpush1.msra.mxu0 %v190
    %192 = vmatprep.subr.mxu0 0.0
    %v193 = vand.u32 %v78, 4294901760
    %194 = vmatpush1.msra.mxu0 %v193
    %195 = vmatprep.subr.mxu0 0.0
    %v196 = vand.u32 %v79, 4294901760
    %197 = vmatpush1.msra.mxu0 %v196
    %198 = vmatprep.subr.mxu0 0.0
    %v199 = vand.u32 %v80, 4294901760
    %200 = vmatpush1.msra.mxu0 %v199
    %201 = vmatprep.subr.mxu0 0.0
    %v202 = vand.u32 %v81, 4294901760
    %203 = vmatpush1.msra.mxu0 %v202
    %204 = vmatprep.subr.mxu0 0.0
    %v205 = vand.u32 %v82, 4294901760
    %206 = vmatpush1.msra.mxu0 %v205
    %207 = vmatprep.subr.mxu0 0.0
    %v208 = vand.u32 %v83, 4294901760
    %209 = vmatpush1.msra.mxu0 %v208
    %210 = vmatprep.subr.mxu0 0.0
    %v211 = vand.u32 %v84, 4294901760
    %212 = vmatpush1.msra.mxu0 %v211
    %v213 = vand.u32 %v40, 4294901760
    %v214 = vsub.f32 %v40, %v213
    %v215 = vand.u32 %v214, 4294901760
    %v216 = vsub.f32 %v214, %v215
    %v217 = vand.u32 %v216, 4294901760
    %218 = vmatprep.mubr.f32.mxu0 %v217
    %v219 = vand.u32 %v34, 4294901760
    %v220 = vsub.f32 %v34, %v219
    %v221 = vand.u32 %v220, 4294901760
    %v222 = vsub.f32 %v220, %v221
    %v223 = vand.u32 %v222, 4294901760
    %224 = vmatmul.mubr.f32.gmra.mrb[0].mxu0 %v223
    %v225 = vpop.f32.mrb[0].mxu0
    %v226 = vadd.f32 0.0, %v225
    %v227 = vpop.f32.mrb[0].mxu0
    %228 = vdwg.mxu0
    %229 = vmatprep.subr.mxu0 0.0
    %v230 = vand.u32 %v53, 4294901760
    %v231 = vsub.f32 %v53, %v230
    %v232 = vand.u32 %v231, 4294901760
    %v233 = vsub.f32 %v231, %v232
    %v234 = vand.u32 %v233, 4294901760
    %235 = vmatpush1.msra.mxu0 %v234
    %236 = vmatprep.subr.mxu0 0.0
    %v237 = vand.u32 %v54, 4294901760
    %v238 = vsub.f32 %v54, %v237
    %v239 = vand.u32 %v238, 4294901760
    %v240 = vsub.f32 %v238, %v239
    %v241 = vand.u32 %v240, 4294901760
    %242 = vmatpush1.msra.mxu0 %v241
    %243 = vmatprep.subr.mxu0 0.0
    %v244 = vand.u32 %v55, 4294901760
    %v245 = vsub.f32 %v55, %v244
    %v246 = vand.u32 %v245, 4294901760
    %v247 = vsub.f32 %v245, %v246
    %v248 = vand.u32 %v247, 4294901760
    %249 = vmatpush1.msra.mxu0 %v248
    %250 = vmatprep.subr.mxu0 0.0
    %v251 = vand.u32 %v56, 4294901760
    %v252 = vsub.f32 %v56, %v251
    %v253 = vand.u32 %v252, 4294901760
    %v254 = vsub.f32 %v252, %v253
    %v255 = vand.u32 %v254, 4294901760
    %256 = vmatpush1.msra.mxu0 %v255
    %257 = vmatprep.subr.mxu0 0.0
    %v258 = vand.u32 %v57, 4294901760
    %v259 = vsub.f32 %v57, %v258
    %v260 = vand.u32 %v259, 4294901760
    %v261 = vsub.f32 %v259, %v260
    %v262 = vand.u32 %v261, 4294901760
    %263 = vmatpush1.msra.mxu0 %v262
    %264 = vmatprep.subr.mxu0 0.0
    %v265 = vand.u32 %v58, 4294901760
    %v266 = vsub.f32 %v58, %v265
    %v267 = vand.u32 %v266, 4294901760
    %v268 = vsub.f32 %v266, %v267
    %v269 = vand.u32 %v268, 4294901760
    %270 = vmatpush1.msra.mxu0 %v269
    %271 = vmatprep.subr.mxu0 0.0
    %v272 = vand.u32 %v59, 4294901760
    %v273 = vsub.f32 %v59, %v272
    %v274 = vand.u32 %v273, 4294901760
    %v275 = vsub.f32 %v273, %v274
    %v276 = vand.u32 %v275, 4294901760
    %277 = vmatpush1.msra.mxu0 %v276
    %278 = vmatprep.subr.mxu0 0.0
    %v279 = vand.u32 %v60, 4294901760
    %v280 = vsub.f32 %v60, %v279
    %v281 = vand.u32 %v280, 4294901760
    %v282 = vsub.f32 %v280, %v281
    %v283 = vand.u32 %v282, 4294901760
    %284 = vmatpush1.msra.mxu0 %v283
    %285 = vmatprep.subr.mxu0 0.0
    %v286 = vand.u32 %v61, 4294901760
    %v287 = vsub.f32 %v61, %v286
    %v288 = vand.u32 %v287, 4294901760
    %v289 = vsub.f32 %v287, %v288
    %v290 = vand.u32 %v289, 4294901760
    %291 = vmatpush1.msra.mxu0 %v290
    %292 = vmatprep.subr.mxu0 0.0
    %v293 = vand.u32 %v62, 4294901760
    %v294 = vsub.f32 %v62, %v293
    %v295 = vand.u32 %v294, 4294901760
    %v296 = vsub.f32 %v294, %v295
    %v297 = vand.u32 %v296, 4294901760
    %298 = vmatpush1.msra.mxu0 %v297
    %299 = vmatprep.subr.mxu0 0.0
    %v300 = vand.u32 %v63, 4294901760
    %v301 = vsub.f32 %v63, %v300
    %v302 = vand.u32 %v301, 4294901760
    %v303 = vsub.f32 %v301, %v302
    %v304 = vand.u32 %v303, 4294901760
    %305 = vmatpush1.msra.mxu0 %v304
    %306 = vmatprep.subr.mxu0 0.0
    %v307 = vand.u32 %v64, 4294901760
    %v308 = vsub.f32 %v64, %v307
    %v309 = vand.u32 %v308, 4294901760
    %v310 = vsub.f32 %v308, %v309
    %v311 = vand.u32 %v310, 4294901760
    %312 = vmatpush1.msra.mxu0 %v311
    %313 = vmatprep.subr.mxu0 0.0
    %v314 = vand.u32 %v65, 4294901760
    %v315 = vsub.f32 %v65, %v314
    %v316 = vand.u32 %v315, 4294901760
    %v317 = vsub.f32 %v315, %v316
    %v318 = vand.u32 %v317, 4294901760
    %319 = vmatpush1.msra.mxu0 %v318
    %320 = vmatprep.subr.mxu0 0.0
    %v321 = vand.u32 %v66, 4294901760
    %v322 = vsub.f32 %v66, %v321
    %v323 = vand.u32 %v322, 4294901760
    %v324 = vsub.f32 %v322, %v323
    %v325 = vand.u32 %v324, 4294901760
    %326 = vmatpush1.msra.mxu0 %v325
    %327 = vmatprep.subr.mxu0 0.0
    %v328 = vand.u32 %v67, 4294901760
    %v329 = vsub.f32 %v67, %v328
    %v330 = vand.u32 %v329, 4294901760
    %v331 = vsub.f32 %v329, %v330
    %v332 = vand.u32 %v331, 4294901760
    %333 = vmatpush1.msra.mxu0 %v332
    %334 = vmatprep.subr.mxu0 0.0
    %v335 = vand.u32 %v68, 4294901760
    %v336 = vsub.f32 %v68, %v335
    %v337 = vand.u32 %v336, 4294901760
    %v338 = vsub.f32 %v336, %v337
    %v339 = vand.u32 %v338, 4294901760
    %340 = vmatpush1.msra.mxu0 %v339
    %341 = vmatprep.subr.mxu0 0.0
    %v342 = vand.u32 %v69, 4294901760
    %v343 = vsub.f32 %v69, %v342
    %v344 = vand.u32 %v343, 4294901760
    %v345 = vsub.f32 %v343, %v344
    %v346 = vand.u32 %v345, 4294901760
    %347 = vmatpush1.msra.mxu0 %v346
    %348 = vmatprep.subr.mxu0 0.0
    %v349 = vand.u32 %v70, 4294901760
    %v350 = vsub.f32 %v70, %v349
    %v351 = vand.u32 %v350, 4294901760
    %v352 = vsub.f32 %v350, %v351
    %v353 = vand.u32 %v352, 4294901760
    %354 = vmatpush1.msra.mxu0 %v353
    %355 = vmatprep.subr.mxu0 0.0
    %v356 = vand.u32 %v71, 4294901760
    %v357 = vsub.f32 %v71, %v356
    %v358 = vand.u32 %v357, 4294901760
    %v359 = vsub.f32 %v357, %v358
    %v360 = vand.u32 %v359, 4294901760
    %361 = vmatpush1.msra.mxu0 %v360
    %362 = vmatprep.subr.mxu0 0.0
    %v363 = vand.u32 %v72, 4294901760
    %v364 = vsub.f32 %v72, %v363
    %v365 = vand.u32 %v364, 4294901760
    %v366 = vsub.f32 %v364, %v365
    %v367 = vand.u32 %v366, 4294901760
    %368 = vmatpush1.msra.mxu0 %v367
    %369 = vmatprep.subr.mxu0 0.0
    %v370 = vand.u32 %v73, 4294901760
    %v371 = vsub.f32 %v73, %v370
    %v372 = vand.u32 %v371, 4294901760
    %v373 = vsub.f32 %v371, %v372
    %v374 = vand.u32 %v373, 4294901760
    %375 = vmatpush1.msra.mxu0 %v374
    %376 = vmatprep.subr.mxu0 0.0
    %v377 = vand.u32 %v74, 4294901760
    %v378 = vsub.f32 %v74, %v377
    %v379 = vand.u32 %v378, 4294901760
    %v380 = vsub.f32 %v378, %v379
    %v381 = vand.u32 %v380, 4294901760
    %382 = vmatpush1.msra.mxu0 %v381
    %383 = vmatprep.subr.mxu0 0.0
    %v384 = vand.u32 %v75, 4294901760
    %v385 = vsub.f32 %v75, %v384
    %v386 = vand.u32 %v385, 4294901760
    %v387 = vsub.f32 %v385, %v386
    %v388 = vand.u32 %v387, 4294901760
    %389 = vmatpush1.msra.mxu0 %v388
    %390 = vmatprep.subr.mxu0 0.0
    %v391 = vand.u32 %v76, 4294901760
    %v392 = vsub.f32 %v76, %v391
    %v393 = vand.u32 %v392, 4294901760
    %v394 = vsub.f32 %v392, %v393
    %v395 = vand.u32 %v394, 4294901760
    %396 = vmatpush1.msra.mxu0 %v395
    %397 = vmatprep.subr.mxu0 0.0
    %v398 = vand.u32 %v77, 4294901760
    %v399 = vsub.f32 %v77, %v398
    %v400 = vand.u32 %v399, 4294901760
    %v401 = vsub.f32 %v399, %v400
    %v402 = vand.u32 %v401, 4294901760
    %403 = vmatpush1.msra.mxu0 %v402
    %404 = vmatprep.subr.mxu0 0.0
    %v405 = vand.u32 %v78, 4294901760
    %v406 = vsub.f32 %v78, %v405
    %v407 = vand.u32 %v406, 4294901760
    %v408 = vsub.f32 %v406, %v407
    %v409 = vand.u32 %v408, 4294901760
    %410 = vmatpush1.msra.mxu0 %v409
    %411 = vmatprep.subr.mxu0 0.0
    %v412 = vand.u32 %v79, 4294901760
    %v413 = vsub.f32 %v79, %v412
    %v414 = vand.u32 %v413, 4294901760
    %v415 = vsub.f32 %v413, %v414
    %v416 = vand.u32 %v415, 4294901760
    %417 = vmatpush1.msra.mxu0 %v416
    %418 = vmatprep.subr.mxu0 0.0
    %v419 = vand.u32 %v80, 4294901760
    %v420 = vsub.f32 %v80, %v419
    %v421 = vand.u32 %v420, 4294901760
    %v422 = vsub.f32 %v420, %v421
    %v423 = vand.u32 %v422, 4294901760
    %424 = vmatpush1.msra.mxu0 %v423
    %425 = vmatprep.subr.mxu0 0.0
    %v426 = vand.u32 %v81, 4294901760
    %v427 = vsub.f32 %v81, %v426
    %v428 = vand.u32 %v427, 4294901760
    %v429 = vsub.f32 %v427, %v428
    %v430 = vand.u32 %v429, 4294901760
    %431 = vmatpush1.msra.mxu0 %v430
    %432 = vmatprep.subr.mxu0 0.0
    %v433 = vand.u32 %v82, 4294901760
    %v434 = vsub.f32 %v82, %v433
    %v435 = vand.u32 %v434, 4294901760
    %v436 = vsub.f32 %v434, %v435
    %v437 = vand.u32 %v436, 4294901760
    %438 = vmatpush1.msra.mxu0 %v437
    %439 = vmatprep.subr.mxu0 0.0
    %v440 = vand.u32 %v83, 4294901760
    %v441 = vsub.f32 %v83, %v440
    %v442 = vand.u32 %v441, 4294901760
    %v443 = vsub.f32 %v441, %v442
    %v444 = vand.u32 %v443, 4294901760
    %445 = vmatpush1.msra.mxu0 %v444
    %446 = vmatprep.subr.mxu0 0.0
    %v447 = vand.u32 %v84, 4294901760
    %v448 = vsub.f32 %v84, %v447
    %v449 = vand.u32 %v448, 4294901760
    %v450 = vsub.f32 %v448, %v449
    %v451 = vand.u32 %v450, 4294901760
    %452 = vmatpush1.msra.mxu0 %v451
    %v453 = vand.u32 %v40, 4294901760
    %454 = vmatprep.mubr.f32.mxu0 %v453
    %v455 = vand.u32 %v34, 4294901760
    %456 = vmatmul.mubr.f32.gmra.mrb[0].mxu0 %v455
    %v457 = vpop.f32.mrb[0].mxu0
    %v458 = vadd.f32 %v226, %v457
    %v459 = vpop.f32.mrb[0].mxu0
    %460 = vdwg.mxu0
    %461 = vmatprep.subr.mxu0 0.0
    %v462 = vand.u32 %v53, 4294901760
    %v463 = vsub.f32 %v53, %v462
    %464 = vmatpush1.msra.mxu0 %v463
    %465 = vmatprep.subr.mxu0 0.0
    %v466 = vand.u32 %v54, 4294901760
    %v467 = vsub.f32 %v54, %v466
    %468 = vmatpush1.msra.mxu0 %v467
    %469 = vmatprep.subr.mxu0 0.0
    %v470 = vand.u32 %v55, 4294901760
    %v471 = vsub.f32 %v55, %v470
    %472 = vmatpush1.msra.mxu0 %v471
    %473 = vmatprep.subr.mxu0 0.0
    %v474 = vand.u32 %v56, 4294901760
    %v475 = vsub.f32 %v56, %v474
    %476 = vmatpush1.msra.mxu0 %v475
    %477 = vmatprep.subr.mxu0 0.0
    %v478 = vand.u32 %v57, 4294901760
    %v479 = vsub.f32 %v57, %v478
    %480 = vmatpush1.msra.mxu0 %v479
    %481 = vmatprep.subr.mxu0 0.0
    %v482 = vand.u32 %v58, 4294901760
    %v483 = vsub.f32 %v58, %v482
    %484 = vmatpush1.msra.mxu0 %v483
    %485 = vmatprep.subr.mxu0 0.0
    %v486 = vand.u32 %v59, 4294901760
    %v487 = vsub.f32 %v59, %v486
    %488 = vmatpush1.msra.mxu0 %v487
    %489 = vmatprep.subr.mxu0 0.0
    %v490 = vand.u32 %v60, 4294901760
    %v491 = vsub.f32 %v60, %v490
    %492 = vmatpush1.msra.mxu0 %v491
    %493 = vmatprep.subr.mxu0 0.0
    %v494 = vand.u32 %v61, 4294901760
    %v495 = vsub.f32 %v61, %v494
    %496 = vmatpush1.msra.mxu0 %v495
    %497 = vmatprep.subr.mxu0 0.0
    %v498 = vand.u32 %v62, 4294901760
    %v499 = vsub.f32 %v62, %v498
    %500 = vmatpush1.msra.mxu0 %v499
    %501 = vmatprep.subr.mxu0 0.0
    %v502 = vand.u32 %v63, 4294901760
    %v503 = vsub.f32 %v63, %v502
    %504 = vmatpush1.msra.mxu0 %v503
    %505 = vmatprep.subr.mxu0 0.0
    %v506 = vand.u32 %v64, 4294901760
    %v507 = vsub.f32 %v64, %v506
    %508 = vmatpush1.msra.mxu0 %v507
    %509 = vmatprep.subr.mxu0 0.0
    %v510 = vand.u32 %v65, 4294901760
    %v511 = vsub.f32 %v65, %v510
    %512 = vmatpush1.msra.mxu0 %v511
    %513 = vmatprep.subr.mxu0 0.0
    %v514 = vand.u32 %v66, 4294901760
    %v515 = vsub.f32 %v66, %v514
    %516 = vmatpush1.msra.mxu0 %v515
    %517 = vmatprep.subr.mxu0 0.0
    %v518 = vand.u32 %v67, 4294901760
    %v519 = vsub.f32 %v67, %v518
    %520 = vmatpush1.msra.mxu0 %v519
    %521 = vmatprep.subr.mxu0 0.0
    %v522 = vand.u32 %v68, 4294901760
    %v523 = vsub.f32 %v68, %v522
    %524 = vmatpush1.msra.mxu0 %v523
    %525 = vmatprep.subr.mxu0 0.0
    %v526 = vand.u32 %v69, 4294901760
    %v527 = vsub.f32 %v69, %v526
    %528 = vmatpush1.msra.mxu0 %v527
    %529 = vmatprep.subr.mxu0 0.0
    %v530 = vand.u32 %v70, 4294901760
    %v531 = vsub.f32 %v70, %v530
    %532 = vmatpush1.msra.mxu0 %v531
    %533 = vmatprep.subr.mxu0 0.0
    %v534 = vand.u32 %v71, 4294901760
    %v535 = vsub.f32 %v71, %v534
    %536 = vmatpush1.msra.mxu0 %v535
    %537 = vmatprep.subr.mxu0 0.0
    %v538 = vand.u32 %v72, 4294901760
    %v539 = vsub.f32 %v72, %v538
    %540 = vmatpush1.msra.mxu0 %v539
    %541 = vmatprep.subr.mxu0 0.0
    %v542 = vand.u32 %v73, 4294901760
    %v543 = vsub.f32 %v73, %v542
    %544 = vmatpush1.msra.mxu0 %v543
    %545 = vmatprep.subr.mxu0 0.0
    %v546 = vand.u32 %v74, 4294901760
    %v547 = vsub.f32 %v74, %v546
    %548 = vmatpush1.msra.mxu0 %v547
    %549 = vmatprep.subr.mxu0 0.0
    %v550 = vand.u32 %v75, 4294901760
    %v551 = vsub.f32 %v75, %v550
    %552 = vmatpush1.msra.mxu0 %v551
    %553 = vmatprep.subr.mxu0 0.0
    %v554 = vand.u32 %v76, 4294901760
    %v555 = vsub.f32 %v76, %v554
    %556 = vmatpush1.msra.mxu0 %v555
    %557 = vmatprep.subr.mxu0 0.0
    %v558 = vand.u32 %v77, 4294901760
    %v559 = vsub.f32 %v77, %v558
    %560 = vmatpush1.msra.mxu0 %v559
    %561 = vmatprep.subr.mxu0 0.0
    %v562 = vand.u32 %v78, 4294901760
    %v563 = vsub.f32 %v78, %v562
    %564 = vmatpush1.msra.mxu0 %v563
    %565 = vmatprep.subr.mxu0 0.0
    %v566 = vand.u32 %v79, 4294901760
    %v567 = vsub.f32 %v79, %v566
    %568 = vmatpush1.msra.mxu0 %v567
    %569 = vmatprep.subr.mxu0 0.0
    %v570 = vand.u32 %v80, 4294901760
    %v571 = vsub.f32 %v80, %v570
    %572 = vmatpush1.msra.mxu0 %v571
    %573 = vmatprep.subr.mxu0 0.0
    %v574 = vand.u32 %v81, 4294901760
    %v575 = vsub.f32 %v81, %v574
    %576 = vmatpush1.msra.mxu0 %v575
    %577 = vmatprep.subr.mxu0 0.0
    %v578 = vand.u32 %v82, 4294901760
    %v579 = vsub.f32 %v82, %v578
    %580 = vmatpush1.msra.mxu0 %v579
    %581 = vmatprep.subr.mxu0 0.0
    %v582 = vand.u32 %v83, 4294901760
    %v583 = vsub.f32 %v83, %v582
    %584 = vmatpush1.msra.mxu0 %v583
    %585 = vmatprep.subr.mxu0 0.0
    %v586 = vand.u32 %v84, 4294901760
    %v587 = vsub.f32 %v84, %v586
    %588 = vmatpush1.msra.mxu0 %v587
    %v589 = vand.u32 %v40, 4294901760
    %v590 = vsub.f32 %v40, %v589
    %591 = vmatprep.mubr.f32.mxu0 %v590
    %v592 = vand.u32 %v34, 4294901760
    %v593 = vsub.f32 %v34, %v592
    %594 = vmatmul.mubr.f32.gmra.mrb[0].mxu0 %v593
    %v595 = vpop.f32.mrb[0].mxu0
    %v596 = vadd.f32 %v458, %v595
    %v597 = vpop.f32.mrb[0].mxu0
    %598 = vdwg.mxu0
    %599 = vmatprep.subr.mxu0 0.0
    %v600 = vand.u32 %v53, 4294901760
    %601 = vmatpush1.msra.mxu0 %v600
    %602 = vmatprep.subr.mxu0 0.0
    %v603 = vand.u32 %v54, 4294901760
    %604 = vmatpush1.msra.mxu0 %v603
    %605 = vmatprep.subr.mxu0 0.0
    %v606 = vand.u32 %v55, 4294901760
    %607 = vmatpush1.msra.mxu0 %v606
    %608 = vmatprep.subr.mxu0 0.0
    %v609 = vand.u32 %v56, 4294901760
    %610 = vmatpush1.msra.mxu0 %v609
    %611 = vmatprep.subr.mxu0 0.0
    %v612 = vand.u32 %v57, 4294901760
    %613 = vmatpush1.msra.mxu0 %v612
    %614 = vmatprep.subr.mxu0 0.0
    %v615 = vand.u32 %v58, 4294901760
    %616 = vmatpush1.msra.mxu0 %v615
    %617 = vmatprep.subr.mxu0 0.0
    %v618 = vand.u32 %v59, 4294901760
    %619 = vmatpush1.msra.mxu0 %v618
    %620 = vmatprep.subr.mxu0 0.0
    %v621 = vand.u32 %v60, 4294901760
    %622 = vmatpush1.msra.mxu0 %v621
    %623 = vmatprep.subr.mxu0 0.0
    %v624 = vand.u32 %v61, 4294901760
    %625 = vmatpush1.msra.mxu0 %v624
    %626 = vmatprep.subr.mxu0 0.0
    %v627 = vand.u32 %v62, 4294901760
    %628 = vmatpush1.msra.mxu0 %v627
    %629 = vmatprep.subr.mxu0 0.0
    %v630 = vand.u32 %v63, 4294901760
    %631 = vmatpush1.msra.mxu0 %v630
    %632 = vmatprep.subr.mxu0 0.0
    %v633 = vand.u32 %v64, 4294901760
    %634 = vmatpush1.msra.mxu0 %v633
    %635 = vmatprep.subr.mxu0 0.0
    %v636 = vand.u32 %v65, 4294901760
    %637 = vmatpush1.msra.mxu0 %v636
    %638 = vmatprep.subr.mxu0 0.0
    %v639 = vand.u32 %v66, 4294901760
    %640 = vmatpush1.msra.mxu0 %v639
    %641 = vmatprep.subr.mxu0 0.0
    %v642 = vand.u32 %v67, 4294901760
    %643 = vmatpush1.msra.mxu0 %v642
    %644 = vmatprep.subr.mxu0 0.0
    %v645 = vand.u32 %v68, 4294901760
    %646 = vmatpush1.msra.mxu0 %v645
    %647 = vmatprep.subr.mxu0 0.0
    %v648 = vand.u32 %v69, 4294901760
    %649 = vmatpush1.msra.mxu0 %v648
    %650 = vmatprep.subr.mxu0 0.0
    %v651 = vand.u32 %v70, 4294901760
    %652 = vmatpush1.msra.mxu0 %v651
    %653 = vmatprep.subr.mxu0 0.0
    %v654 = vand.u32 %v71, 4294901760
    %655 = vmatpush1.msra.mxu0 %v654
    %656 = vmatprep.subr.mxu0 0.0
    %v657 = vand.u32 %v72, 4294901760
    %658 = vmatpush1.msra.mxu0 %v657
    %659 = vmatprep.subr.mxu0 0.0
    %v660 = vand.u32 %v73, 4294901760
    %661 = vmatpush1.msra.mxu0 %v660
    %662 = vmatprep.subr.mxu0 0.0
    %v663 = vand.u32 %v74, 4294901760
    %664 = vmatpush1.msra.mxu0 %v663
    %665 = vmatprep.subr.mxu0 0.0
    %v666 = vand.u32 %v75, 4294901760
    %667 = vmatpush1.msra.mxu0 %v666
    %668 = vmatprep.subr.mxu0 0.0
    %v669 = vand.u32 %v76, 4294901760
    %670 = vmatpush1.msra.mxu0 %v669
    %671 = vmatprep.subr.mxu0 0.0
    %v672 = vand.u32 %v77, 4294901760
    %673 = vmatpush1.msra.mxu0 %v672
    %674 = vmatprep.subr.mxu0 0.0
    %v675 = vand.u32 %v78, 4294901760
    %676 = vmatpush1.msra.mxu0 %v675
    %677 = vmatprep.subr.mxu0 0.0
    %v678 = vand.u32 %v79, 4294901760
    %679 = vmatpush1.msra.mxu0 %v678
    %680 = vmatprep.subr.mxu0 0.0
    %v681 = vand.u32 %v80, 4294901760
    %682 = vmatpush1.msra.mxu0 %v681
    %683 = vmatprep.subr.mxu0 0.0
    %v684 = vand.u32 %v81, 4294901760
    %685 = vmatpush1.msra.mxu0 %v684
    %686 = vmatprep.subr.mxu0 0.0
    %v687 = vand.u32 %v82, 4294901760
    %688 = vmatpush1.msra.mxu0 %v687
    %689 = vmatprep.subr.mxu0 0.0
    %v690 = vand.u32 %v83, 4294901760
    %691 = vmatpush1.msra.mxu0 %v690
    %692 = vmatprep.subr.mxu0 0.0
    %v693 = vand.u32 %v84, 4294901760
    %694 = vmatpush1.msra.mxu0 %v693
    %v695 = vand.u32 %v40, 4294901760
    %v696 = vsub.f32 %v40, %v695
    %v697 = vand.u32 %v696, 4294901760
    %698 = vmatprep.mubr.f32.mxu0 %v697
    %v699 = vand.u32 %v34, 4294901760
    %v700 = vsub.f32 %v34, %v699
    %v701 = vand.u32 %v700, 4294901760
    %702 = vmatmul.mubr.f32.gmra.mrb[0].mxu0 %v701
    %v703 = vpop.f32.mrb[0].mxu0
    %v704 = vadd.f32 %v596, %v703
    %v705 = vpop.f32.mrb[0].mxu0
    %706 = vdwg.mxu0
    %707 = vmatprep.subr.mxu0 0.0
    %v708 = vand.u32 %v53, 4294901760
    %v709 = vsub.f32 %v53, %v708
    %v710 = vand.u32 %v709, 4294901760
    %711 = vmatpush1.msra.mxu0 %v710
    %712 = vmatprep.subr.mxu0 0.0
    %v713 = vand.u32 %v54, 4294901760
    %v714 = vsub.f32 %v54, %v713
    %v715 = vand.u32 %v714, 4294901760
    %716 = vmatpush1.msra.mxu0 %v715
    %717 = vmatprep.subr.mxu0 0.0
    %v718 = vand.u32 %v55, 4294901760
    %v719 = vsub.f32 %v55, %v718
    %v720 = vand.u32 %v719, 4294901760
    %721 = vmatpush1.msra.mxu0 %v720
    %722 = vmatprep.subr.mxu0 0.0
    %v723 = vand.u32 %v56, 4294901760
    %v724 = vsub.f32 %v56, %v723
    %v725 = vand.u32 %v724, 4294901760
    %726 = vmatpush1.msra.mxu0 %v725
    %727 = vmatprep.subr.mxu0 0.0
    %v728 = vand.u32 %v57, 4294901760
    %v729 = vsub.f32 %v57, %v728
    %v730 = vand.u32 %v729, 4294901760
    %731 = vmatpush1.msra.mxu0 %v730
    %732 = vmatprep.subr.mxu0 0.0
    %v733 = vand.u32 %v58, 4294901760
    %v734 = vsub.f32 %v58, %v733
    %v735 = vand.u32 %v734, 4294901760
    %736 = vmatpush1.msra.mxu0 %v735
    %737 = vmatprep.subr.mxu0 0.0
    %v738 = vand.u32 %v59, 4294901760
    %v739 = vsub.f32 %v59, %v738
    %v740 = vand.u32 %v739, 4294901760
    %741 = vmatpush1.msra.mxu0 %v740
    %742 = vmatprep.subr.mxu0 0.0
    %v743 = vand.u32 %v60, 4294901760
    %v744 = vsub.f32 %v60, %v743
    %v745 = vand.u32 %v744, 4294901760
    %746 = vmatpush1.msra.mxu0 %v745
    %747 = vmatprep.subr.mxu0 0.0
    %v748 = vand.u32 %v61, 4294901760
    %v749 = vsub.f32 %v61, %v748
    %v750 = vand.u32 %v749, 4294901760
    %751 = vmatpush1.msra.mxu0 %v750
    %752 = vmatprep.subr.mxu0 0.0
    %v753 = vand.u32 %v62, 4294901760
    %v754 = vsub.f32 %v62, %v753
    %v755 = vand.u32 %v754, 4294901760
    %756 = vmatpush1.msra.mxu0 %v755
    %757 = vmatprep.subr.mxu0 0.0
    %v758 = vand.u32 %v63, 4294901760
    %v759 = vsub.f32 %v63, %v758
    %v760 = vand.u32 %v759, 4294901760
    %761 = vmatpush1.msra.mxu0 %v760
    %762 = vmatprep.subr.mxu0 0.0
    %v763 = vand.u32 %v64, 4294901760
    %v764 = vsub.f32 %v64, %v763
    %v765 = vand.u32 %v764, 4294901760
    %766 = vmatpush1.msra.mxu0 %v765
    %767 = vmatprep.subr.mxu0 0.0
    %v768 = vand.u32 %v65, 4294901760
    %v769 = vsub.f32 %v65, %v768
    %v770 = vand.u32 %v769, 4294901760
    %771 = vmatpush1.msra.mxu0 %v770
    %772 = vmatprep.subr.mxu0 0.0
    %v773 = vand.u32 %v66, 4294901760
    %v774 = vsub.f32 %v66, %v773
    %v775 = vand.u32 %v774, 4294901760
    %776 = vmatpush1.msra.mxu0 %v775
    %777 = vmatprep.subr.mxu0 0.0
    %v778 = vand.u32 %v67, 4294901760
    %v779 = vsub.f32 %v67, %v778
    %v780 = vand.u32 %v779, 4294901760
    %781 = vmatpush1.msra.mxu0 %v780
    %782 = vmatprep.subr.mxu0 0.0
    %v783 = vand.u32 %v68, 4294901760
    %v784 = vsub.f32 %v68, %v783
    %v785 = vand.u32 %v784, 4294901760
    %786 = vmatpush1.msra.mxu0 %v785
    %787 = vmatprep.subr.mxu0 0.0
    %v788 = vand.u32 %v69, 4294901760
    %v789 = vsub.f32 %v69, %v788
    %v790 = vand.u32 %v789, 4294901760
    %791 = vmatpush1.msra.mxu0 %v790
    %792 = vmatprep.subr.mxu0 0.0
    %v793 = vand.u32 %v70, 4294901760
    %v794 = vsub.f32 %v70, %v793
    %v795 = vand.u32 %v794, 4294901760
    %796 = vmatpush1.msra.mxu0 %v795
    %797 = vmatprep.subr.mxu0 0.0
    %v798 = vand.u32 %v71, 4294901760
    %v799 = vsub.f32 %v71, %v798
    %v800 = vand.u32 %v799, 4294901760
    %801 = vmatpush1.msra.mxu0 %v800
    %802 = vmatprep.subr.mxu0 0.0
    %v803 = vand.u32 %v72, 4294901760
    %v804 = vsub.f32 %v72, %v803
    %v805 = vand.u32 %v804, 4294901760
    %806 = vmatpush1.msra.mxu0 %v805
    %807 = vmatprep.subr.mxu0 0.0
    %v808 = vand.u32 %v73, 4294901760
    %v809 = vsub.f32 %v73, %v808
    %v810 = vand.u32 %v809, 4294901760
    %811 = vmatpush1.msra.mxu0 %v810
    %812 = vmatprep.subr.mxu0 0.0
    %v813 = vand.u32 %v74, 4294901760
    %v814 = vsub.f32 %v74, %v813
    %v815 = vand.u32 %v814, 4294901760
    %816 = vmatpush1.msra.mxu0 %v815
    %817 = vmatprep.subr.mxu0 0.0
    %v818 = vand.u32 %v75, 4294901760
    %v819 = vsub.f32 %v75, %v818
    %v820 = vand.u32 %v819, 4294901760
    %821 = vmatpush1.msra.mxu0 %v820
    %822 = vmatprep.subr.mxu0 0.0
    %v823 = vand.u32 %v76, 4294901760
    %v824 = vsub.f32 %v76, %v823
    %v825 = vand.u32 %v824, 4294901760
    %826 = vmatpush1.msra.mxu0 %v825
    %827 = vmatprep.subr.mxu0 0.0
    %v828 = vand.u32 %v77, 4294901760
    %v829 = vsub.f32 %v77, %v828
    %v830 = vand.u32 %v829, 4294901760
    %831 = vmatpush1.msra.mxu0 %v830
    %832 = vmatprep.subr.mxu0 0.0
    %v833 = vand.u32 %v78, 4294901760
    %v834 = vsub.f32 %v78, %v833
    %v835 = vand.u32 %v834, 4294901760
    %836 = vmatpush1.msra.mxu0 %v835
    %837 = vmatprep.subr.mxu0 0.0
    %v838 = vand.u32 %v79, 4294901760
    %v839 = vsub.f32 %v79, %v838
    %v840 = vand.u32 %v839, 4294901760
    %841 = vmatpush1.msra.mxu0 %v840
    %842 = vmatprep.subr.mxu0 0.0
    %v843 = vand.u32 %v80, 4294901760
    %v844 = vsub.f32 %v80, %v843
    %v845 = vand.u32 %v844, 4294901760
    %846 = vmatpush1.msra.mxu0 %v845
    %847 = vmatprep.subr.mxu0 0.0
    %v848 = vand.u32 %v81, 4294901760
    %v849 = vsub.f32 %v81, %v848
    %v850 = vand.u32 %v849, 4294901760
    %851 = vmatpush1.msra.mxu0 %v850
    %852 = vmatprep.subr.mxu0 0.0
    %v853 = vand.u32 %v82, 4294901760
    %v854 = vsub.f32 %v82, %v853
    %v855 = vand.u32 %v854, 4294901760
    %856 = vmatpush1.msra.mxu0 %v855
    %857 = vmatprep.subr.mxu0 0.0
    %v858 = vand.u32 %v83, 4294901760
    %v859 = vsub.f32 %v83, %v858
    %v860 = vand.u32 %v859, 4294901760
    %861 = vmatpush1.msra.mxu0 %v860
    %862 = vmatprep.subr.mxu0 0.0
    %v863 = vand.u32 %v84, 4294901760
    %v864 = vsub.f32 %v84, %v863
    %v865 = vand.u32 %v864, 4294901760
    %866 = vmatpush1.msra.mxu0 %v865
    %v867 = vand.u32 %v40, 4294901760
    %868 = vmatprep.mubr.f32.mxu0 %v867
    %v869 = vand.u32 %v34, 4294901760
    %870 = vmatmul.mubr.f32.gmra.mrb[0].mxu0 %v869
    %v871 = vpop.f32.mrb[0].mxu0
    %v872 = vadd.f32 %v704, %v871
    %v873 = vpop.f32.mrb[0].mxu0
    %874 = vdwg.mxu0
    %875 = vmatprep.subr.mxu0 0.0
    %v876 = vand.u32 %v53, 4294901760
    %877 = vmatpush1.msra.mxu0 %v876
    %878 = vmatprep.subr.mxu0 0.0
    %v879 = vand.u32 %v54, 4294901760
    %880 = vmatpush1.msra.mxu0 %v879
    %881 = vmatprep.subr.mxu0 0.0
    %v882 = vand.u32 %v55, 4294901760
    %883 = vmatpush1.msra.mxu0 %v882
    %884 = vmatprep.subr.mxu0 0.0
    %v885 = vand.u32 %v56, 4294901760
    %886 = vmatpush1.msra.mxu0 %v885
    %887 = vmatprep.subr.mxu0 0.0
    %v888 = vand.u32 %v57, 4294901760
    %889 = vmatpush1.msra.mxu0 %v888
    %890 = vmatprep.subr.mxu0 0.0
    %v891 = vand.u32 %v58, 4294901760
    %892 = vmatpush1.msra.mxu0 %v891
    %893 = vmatprep.subr.mxu0 0.0
    %v894 = vand.u32 %v59, 4294901760
    %895 = vmatpush1.msra.mxu0 %v894
    %896 = vmatprep.subr.mxu0 0.0
    %v897 = vand.u32 %v60, 4294901760
    %898 = vmatpush1.msra.mxu0 %v897
    %899 = vmatprep.subr.mxu0 0.0
    %v900 = vand.u32 %v61, 4294901760
    %901 = vmatpush1.msra.mxu0 %v900
    %902 = vmatprep.subr.mxu0 0.0
    %v903 = vand.u32 %v62, 4294901760
    %904 = vmatpush1.msra.mxu0 %v903
    %905 = vmatprep.subr.mxu0 0.0
    %v906 = vand.u32 %v63, 4294901760
    %907 = vmatpush1.msra.mxu0 %v906
    %908 = vmatprep.subr.mxu0 0.0
    %v909 = vand.u32 %v64, 4294901760
    %910 = vmatpush1.msra.mxu0 %v909
    %911 = vmatprep.subr.mxu0 0.0
    %v912 = vand.u32 %v65, 4294901760
    %913 = vmatpush1.msra.mxu0 %v912
    %914 = vmatprep.subr.mxu0 0.0
    %v915 = vand.u32 %v66, 4294901760
    %916 = vmatpush1.msra.mxu0 %v915
    %917 = vmatprep.subr.mxu0 0.0
    %v918 = vand.u32 %v67, 4294901760
    %919 = vmatpush1.msra.mxu0 %v918
    %920 = vmatprep.subr.mxu0 0.0
    %v921 = vand.u32 %v68, 4294901760
    %922 = vmatpush1.msra.mxu0 %v921
    %923 = vmatprep.subr.mxu0 0.0
    %v924 = vand.u32 %v69, 4294901760
    %925 = vmatpush1.msra.mxu0 %v924
    %926 = vmatprep.subr.mxu0 0.0
    %v927 = vand.u32 %v70, 4294901760
    %928 = vmatpush1.msra.mxu0 %v927
    %929 = vmatprep.subr.mxu0 0.0
    %v930 = vand.u32 %v71, 4294901760
    %931 = vmatpush1.msra.mxu0 %v930
    %932 = vmatprep.subr.mxu0 0.0
    %v933 = vand.u32 %v72, 4294901760
    %934 = vmatpush1.msra.mxu0 %v933
    %935 = vmatprep.subr.mxu0 0.0
    %v936 = vand.u32 %v73, 4294901760
    %937 = vmatpush1.msra.mxu0 %v936
    %938 = vmatprep.subr.mxu0 0.0
    %v939 = vand.u32 %v74, 4294901760
    %940 = vmatpush1.msra.mxu0 %v939
    %941 = vmatprep.subr.mxu0 0.0
    %v942 = vand.u32 %v75, 4294901760
    %943 = vmatpush1.msra.mxu0 %v942
    %944 = vmatprep.subr.mxu0 0.0
    %v945 = vand.u32 %v76, 4294901760
    %946 = vmatpush1.msra.mxu0 %v945
    %947 = vmatprep.subr.mxu0 0.0
    %v948 = vand.u32 %v77, 4294901760
    %949 = vmatpush1.msra.mxu0 %v948
    %950 = vmatprep.subr.mxu0 0.0
    %v951 = vand.u32 %v78, 4294901760
    %952 = vmatpush1.msra.mxu0 %v951
    %953 = vmatprep.subr.mxu0 0.0
    %v954 = vand.u32 %v79, 4294901760
    %955 = vmatpush1.msra.mxu0 %v954
    %956 = vmatprep.subr.mxu0 0.0
    %v957 = vand.u32 %v80, 4294901760
    %958 = vmatpush1.msra.mxu0 %v957
    %959 = vmatprep.subr.mxu0 0.0
    %v960 = vand.u32 %v81, 4294901760
    %961 = vmatpush1.msra.mxu0 %v960
    %962 = vmatprep.subr.mxu0 0.0
    %v963 = vand.u32 %v82, 4294901760
    %964 = vmatpush1.msra.mxu0 %v963
    %965 = vmatprep.subr.mxu0 0.0
    %v966 = vand.u32 %v83, 4294901760
    %967 = vmatpush1.msra.mxu0 %v966
    %968 = vmatprep.subr.mxu0 0.0
    %v969 = vand.u32 %v84, 4294901760
    %970 = vmatpush1.msra.mxu0 %v969
    %v971 = vand.u32 %v40, 4294901760
    %972 = vmatprep.mubr.f32.mxu0 %v971
    %v973 = vand.u32 %v34, 4294901760
    %974 = vmatmul.mubr.f32.gmra.mrb[0].mxu0 %v973
    %v975 = vpop.f32.mrb[0].mxu0
    %v976 = vadd.f32 %v872, %v975
    %v977 = vpop.f32.mrb[0].mxu0
    %978 = vdwg.mxu0
    %979 = vmatprep.subr.mxu0 0.0
    %v980 = vand.u32 %v85, 4294901760
    %981 = vmatpush1.msra.mxu0 %v980
    %982 = vmatprep.subr.mxu0 0.0
    %v983 = vand.u32 %v86, 4294901760
    %984 = vmatpush1.msra.mxu0 %v983
    %985 = vmatprep.subr.mxu0 0.0
    %v986 = vand.u32 %v87, 4294901760
    %987 = vmatpush1.msra.mxu0 %v986
    %988 = vmatprep.subr.mxu0 0.0
    %v989 = vand.u32 %v88, 4294901760
    %990 = vmatpush1.msra.mxu0 %v989
    %991 = vmatprep.subr.mxu0 0.0
    %v992 = vand.u32 %v89, 4294901760
    %993 = vmatpush1.msra.mxu0 %v992
    %994 = vmatprep.subr.mxu0 0.0
    %v995 = vand.u32 %v90, 4294901760
    %996 = vmatpush1.msra.mxu0 %v995
    %997 = vmatprep.subr.mxu0 0.0
    %v998 = vand.u32 %v91, 4294901760
    %999 = vmatpush1.msra.mxu0 %v998
    %1000 = vmatprep.subr.mxu0 0.0
    %v1001 = vand.u32 %v92, 4294901760
    %1002 = vmatpush1.msra.mxu0 %v1001
    %1003 = vmatprep.subr.mxu0 0.0
    %v1004 = vand.u32 %v93, 4294901760
    %1005 = vmatpush1.msra.mxu0 %v1004
    %1006 = vmatprep.subr.mxu0 0.0
    %v1007 = vand.u32 %v94, 4294901760
    %1008 = vmatpush1.msra.mxu0 %v1007
    %1009 = vmatprep.subr.mxu0 0.0
    %v1010 = vand.u32 %v95, 4294901760
    %1011 = vmatpush1.msra.mxu0 %v1010
    %1012 = vmatprep.subr.mxu0 0.0
    %v1013 = vand.u32 %v96, 4294901760
    %1014 = vmatpush1.msra.mxu0 %v1013
    %1015 = vmatprep.subr.mxu0 0.0
    %v1016 = vand.u32 %v97, 4294901760
    %1017 = vmatpush1.msra.mxu0 %v1016
    %1018 = vmatprep.subr.mxu0 0.0
    %v1019 = vand.u32 %v98, 4294901760
    %1020 = vmatpush1.msra.mxu0 %v1019
    %1021 = vmatprep.subr.mxu0 0.0
    %v1022 = vand.u32 %v99, 4294901760
    %1023 = vmatpush1.msra.mxu0 %v1022
    %1024 = vmatprep.subr.mxu0 0.0
    %v1025 = vand.u32 %v100, 4294901760
    %1026 = vmatpush1.msra.mxu0 %v1025
    %1027 = vmatprep.subr.mxu0 0.0
    %v1028 = vand.u32 %v101, 4294901760
    %1029 = vmatpush1.msra.mxu0 %v1028
    %1030 = vmatprep.subr.mxu0 0.0
    %v1031 = vand.u32 %v102, 4294901760
    %1032 = vmatpush1.msra.mxu0 %v1031
    %1033 = vmatprep.subr.mxu0 0.0
    %v1034 = vand.u32 %v103, 4294901760
    %1035 = vmatpush1.msra.mxu0 %v1034
    %1036 = vmatprep.subr.mxu0 0.0
    %v1037 = vand.u32 %v104, 4294901760
    %1038 = vmatpush1.msra.mxu0 %v1037
    %1039 = vmatprep.subr.mxu0 0.0
    %v1040 = vand.u32 %v105, 4294901760
    %1041 = vmatpush1.msra.mxu0 %v1040
    %1042 = vmatprep.subr.mxu0 0.0
    %v1043 = vand.u32 %v106, 4294901760
    %1044 = vmatpush1.msra.mxu0 %v1043
    %1045 = vmatprep.subr.mxu0 0.0
    %v1046 = vand.u32 %v107, 4294901760
    %1047 = vmatpush1.msra.mxu0 %v1046
    %1048 = vmatprep.subr.mxu0 0.0
    %v1049 = vand.u32 %v108, 4294901760
    %1050 = vmatpush1.msra.mxu0 %v1049
    %1051 = vmatprep.subr.mxu0 0.0
    %v1052 = vand.u32 %v109, 4294901760
    %1053 = vmatpush1.msra.mxu0 %v1052
    %1054 = vmatprep.subr.mxu0 0.0
    %v1055 = vand.u32 %v110, 4294901760
    %1056 = vmatpush1.msra.mxu0 %v1055
    %1057 = vmatprep.subr.mxu0 0.0
    %v1058 = vand.u32 %v111, 4294901760
    %1059 = vmatpush1.msra.mxu0 %v1058
    %1060 = vmatprep.subr.mxu0 0.0
    %v1061 = vand.u32 %v112, 4294901760
    %1062 = vmatpush1.msra.mxu0 %v1061
    %1063 = vmatprep.subr.mxu0 0.0
    %v1064 = vand.u32 %v113, 4294901760
    %1065 = vmatpush1.msra.mxu0 %v1064
    %1066 = vmatprep.subr.mxu0 0.0
    %v1067 = vand.u32 %v114, 4294901760
    %1068 = vmatpush1.msra.mxu0 %v1067
    %1069 = vmatprep.subr.mxu0 0.0
    %v1070 = vand.u32 %v115, 4294901760
    %1071 = vmatpush1.msra.mxu0 %v1070
    %1072 = vmatprep.subr.mxu0 0.0
    %v1073 = vand.u32 %v116, 4294901760
    %1074 = vmatpush1.msra.mxu0 %v1073
    %v1075 = vand.u32 %v52, 4294901760
    %v1076 = vsub.f32 %v52, %v1075
    %v1077 = vand.u32 %v1076, 4294901760
    %v1078 = vsub.f32 %v1076, %v1077
    %v1079 = vand.u32 %v1078, 4294901760
    %1080 = vmatprep.mubr.f32.mxu0 %v1079
    %v1081 = vand.u32 %v46, 4294901760
    %v1082 = vsub.f32 %v46, %v1081
    %v1083 = vand.u32 %v1082, 4294901760
    %v1084 = vsub.f32 %v1082, %v1083
    %v1085 = vand.u32 %v1084, 4294901760
    %1086 = vmatmul.mubr.f32.gmra.mrb[0].mxu0 %v1085
    %v1087 = vpop.f32.mrb[0].mxu0
    %v1088 = vadd.f32 %v976, %v1087
    %v1089 = vpop.f32.mrb[0].mxu0
    %1090 = vdwg.mxu0
    %1091 = vmatprep.subr.mxu0 0.0
    %v1092 = vand.u32 %v85, 4294901760
    %v1093 = vsub.f32 %v85, %v1092
    %v1094 = vand.u32 %v1093, 4294901760
    %v1095 = vsub.f32 %v1093, %v1094
    %v1096 = vand.u32 %v1095, 4294901760
    %1097 = vmatpush1.msra.mxu0 %v1096
    %1098 = vmatprep.subr.mxu0 0.0
    %v1099 = vand.u32 %v86, 4294901760
    %v1100 = vsub.f32 %v86, %v1099
    %v1101 = vand.u32 %v1100, 4294901760
    %v1102 = vsub.f32 %v1100, %v1101
    %v1103 = vand.u32 %v1102, 4294901760
    %1104 = vmatpush1.msra.mxu0 %v1103
    %1105 = vmatprep.subr.mxu0 0.0
    %v1106 = vand.u32 %v87, 4294901760
    %v1107 = vsub.f32 %v87, %v1106
    %v1108 = vand.u32 %v1107, 4294901760
    %v1109 = vsub.f32 %v1107, %v1108
    %v1110 = vand.u32 %v1109, 4294901760
    %1111 = vmatpush1.msra.mxu0 %v1110
    %1112 = vmatprep.subr.mxu0 0.0
    %v1113 = vand.u32 %v88, 4294901760
    %v1114 = vsub.f32 %v88, %v1113
    %v1115 = vand.u32 %v1114, 4294901760
    %v1116 = vsub.f32 %v1114, %v1115
    %v1117 = vand.u32 %v1116, 4294901760
    %1118 = vmatpush1.msra.mxu0 %v1117
    %1119 = vmatprep.subr.mxu0 0.0
    %v1120 = vand.u32 %v89, 4294901760
    %v1121 = vsub.f32 %v89, %v1120
    %v1122 = vand.u32 %v1121, 4294901760
    %v1123 = vsub.f32 %v1121, %v1122
    %v1124 = vand.u32 %v1123, 4294901760
    %1125 = vmatpush1.msra.mxu0 %v1124
    %1126 = vmatprep.subr.mxu0 0.0
    %v1127 = vand.u32 %v90, 4294901760
    %v1128 = vsub.f32 %v90, %v1127
    %v1129 = vand.u32 %v1128, 4294901760
    %v1130 = vsub.f32 %v1128, %v1129
    %v1131 = vand.u32 %v1130, 4294901760
    %1132 = vmatpush1.msra.mxu0 %v1131
    %1133 = vmatprep.subr.mxu0 0.0
    %v1134 = vand.u32 %v91, 4294901760
    %v1135 = vsub.f32 %v91, %v1134
    %v1136 = vand.u32 %v1135, 4294901760
    %v1137 = vsub.f32 %v1135, %v1136
    %v1138 = vand.u32 %v1137, 4294901760
    %1139 = vmatpush1.msra.mxu0 %v1138
    %1140 = vmatprep.subr.mxu0 0.0
    %v1141 = vand.u32 %v92, 4294901760
    %v1142 = vsub.f32 %v92, %v1141
    %v1143 = vand.u32 %v1142, 4294901760
    %v1144 = vsub.f32 %v1142, %v1143
    %v1145 = vand.u32 %v1144, 4294901760
    %1146 = vmatpush1.msra.mxu0 %v1145
    %1147 = vmatprep.subr.mxu0 0.0
    %v1148 = vand.u32 %v93, 4294901760
    %v1149 = vsub.f32 %v93, %v1148
    %v1150 = vand.u32 %v1149, 4294901760
    %v1151 = vsub.f32 %v1149, %v1150
    %v1152 = vand.u32 %v1151, 4294901760
    %1153 = vmatpush1.msra.mxu0 %v1152
    %1154 = vmatprep.subr.mxu0 0.0
    %v1155 = vand.u32 %v94, 4294901760
    %v1156 = vsub.f32 %v94, %v1155
    %v1157 = vand.u32 %v1156, 4294901760
    %v1158 = vsub.f32 %v1156, %v1157
    %v1159 = vand.u32 %v1158, 4294901760
    %1160 = vmatpush1.msra.mxu0 %v1159
    %1161 = vmatprep.subr.mxu0 0.0
    %v1162 = vand.u32 %v95, 4294901760
    %v1163 = vsub.f32 %v95, %v1162
    %v1164 = vand.u32 %v1163, 4294901760
    %v1165 = vsub.f32 %v1163, %v1164
    %v1166 = vand.u32 %v1165, 4294901760
    %1167 = vmatpush1.msra.mxu0 %v1166
    %1168 = vmatprep.subr.mxu0 0.0
    %v1169 = vand.u32 %v96, 4294901760
    %v1170 = vsub.f32 %v96, %v1169
    %v1171 = vand.u32 %v1170, 4294901760
    %v1172 = vsub.f32 %v1170, %v1171
    %v1173 = vand.u32 %v1172, 4294901760
    %1174 = vmatpush1.msra.mxu0 %v1173
    %1175 = vmatprep.subr.mxu0 0.0
    %v1176 = vand.u32 %v97, 4294901760
    %v1177 = vsub.f32 %v97, %v1176
    %v1178 = vand.u32 %v1177, 4294901760
    %v1179 = vsub.f32 %v1177, %v1178
    %v1180 = vand.u32 %v1179, 4294901760
    %1181 = vmatpush1.msra.mxu0 %v1180
    %1182 = vmatprep.subr.mxu0 0.0
    %v1183 = vand.u32 %v98, 4294901760
    %v1184 = vsub.f32 %v98, %v1183
    %v1185 = vand.u32 %v1184, 4294901760
    %v1186 = vsub.f32 %v1184, %v1185
    %v1187 = vand.u32 %v1186, 4294901760
    %1188 = vmatpush1.msra.mxu0 %v1187
    %1189 = vmatprep.subr.mxu0 0.0
    %v1190 = vand.u32 %v99, 4294901760
    %v1191 = vsub.f32 %v99, %v1190
    %v1192 = vand.u32 %v1191, 4294901760
    %v1193 = vsub.f32 %v1191, %v1192
    %v1194 = vand.u32 %v1193, 4294901760
    %1195 = vmatpush1.msra.mxu0 %v1194
    %1196 = vmatprep.subr.mxu0 0.0
    %v1197 = vand.u32 %v100, 4294901760
    %v1198 = vsub.f32 %v100, %v1197
    %v1199 = vand.u32 %v1198, 4294901760
    %v1200 = vsub.f32 %v1198, %v1199
    %v1201 = vand.u32 %v1200, 4294901760
    %1202 = vmatpush1.msra.mxu0 %v1201
    %1203 = vmatprep.subr.mxu0 0.0
    %v1204 = vand.u32 %v101, 4294901760
    %v1205 = vsub.f32 %v101, %v1204
    %v1206 = vand.u32 %v1205, 4294901760
    %v1207 = vsub.f32 %v1205, %v1206
    %v1208 = vand.u32 %v1207, 4294901760
    %1209 = vmatpush1.msra.mxu0 %v1208
    %1210 = vmatprep.subr.mxu0 0.0
    %v1211 = vand.u32 %v102, 4294901760
    %v1212 = vsub.f32 %v102, %v1211
    %v1213 = vand.u32 %v1212, 4294901760
    %v1214 = vsub.f32 %v1212, %v1213
    %v1215 = vand.u32 %v1214, 4294901760
    %1216 = vmatpush1.msra.mxu0 %v1215
    %1217 = vmatprep.subr.mxu0 0.0
    %v1218 = vand.u32 %v103, 4294901760
    %v1219 = vsub.f32 %v103, %v1218
    %v1220 = vand.u32 %v1219, 4294901760
    %v1221 = vsub.f32 %v1219, %v1220
    %v1222 = vand.u32 %v1221, 4294901760
    %1223 = vmatpush1.msra.mxu0 %v1222
    %1224 = vmatprep.subr.mxu0 0.0
    %v1225 = vand.u32 %v104, 4294901760
    %v1226 = vsub.f32 %v104, %v1225
    %v1227 = vand.u32 %v1226, 4294901760
    %v1228 = vsub.f32 %v1226, %v1227
    %v1229 = vand.u32 %v1228, 4294901760
    %1230 = vmatpush1.msra.mxu0 %v1229
    %1231 = vmatprep.subr.mxu0 0.0
    %v1232 = vand.u32 %v105, 4294901760
    %v1233 = vsub.f32 %v105, %v1232
    %v1234 = vand.u32 %v1233, 4294901760
    %v1235 = vsub.f32 %v1233, %v1234
    %v1236 = vand.u32 %v1235, 4294901760
    %1237 = vmatpush1.msra.mxu0 %v1236
    %1238 = vmatprep.subr.mxu0 0.0
    %v1239 = vand.u32 %v106, 4294901760
    %v1240 = vsub.f32 %v106, %v1239
    %v1241 = vand.u32 %v1240, 4294901760
    %v1242 = vsub.f32 %v1240, %v1241
    %v1243 = vand.u32 %v1242, 4294901760
    %1244 = vmatpush1.msra.mxu0 %v1243
    %1245 = vmatprep.subr.mxu0 0.0
    %v1246 = vand.u32 %v107, 4294901760
    %v1247 = vsub.f32 %v107, %v1246
    %v1248 = vand.u32 %v1247, 4294901760
    %v1249 = vsub.f32 %v1247, %v1248
    %v1250 = vand.u32 %v1249, 4294901760
    %1251 = vmatpush1.msra.mxu0 %v1250
    %1252 = vmatprep.subr.mxu0 0.0
    %v1253 = vand.u32 %v108, 4294901760
    %v1254 = vsub.f32 %v108, %v1253
    %v1255 = vand.u32 %v1254, 4294901760
    %v1256 = vsub.f32 %v1254, %v1255
    %v1257 = vand.u32 %v1256, 4294901760
    %1258 = vmatpush1.msra.mxu0 %v1257
    %1259 = vmatprep.subr.mxu0 0.0
    %v1260 = vand.u32 %v109, 4294901760
    %v1261 = vsub.f32 %v109, %v1260
    %v1262 = vand.u32 %v1261, 4294901760
    %v1263 = vsub.f32 %v1261, %v1262
    %v1264 = vand.u32 %v1263, 4294901760
    %1265 = vmatpush1.msra.mxu0 %v1264
    %1266 = vmatprep.subr.mxu0 0.0
    %v1267 = vand.u32 %v110, 4294901760
    %v1268 = vsub.f32 %v110, %v1267
    %v1269 = vand.u32 %v1268, 4294901760
    %v1270 = vsub.f32 %v1268, %v1269
    %v1271 = vand.u32 %v1270, 4294901760
    %1272 = vmatpush1.msra.mxu0 %v1271
    %1273 = vmatprep.subr.mxu0 0.0
    %v1274 = vand.u32 %v111, 4294901760
    %v1275 = vsub.f32 %v111, %v1274
    %v1276 = vand.u32 %v1275, 4294901760
    %v1277 = vsub.f32 %v1275, %v1276
    %v1278 = vand.u32 %v1277, 4294901760
    %1279 = vmatpush1.msra.mxu0 %v1278
    %1280 = vmatprep.subr.mxu0 0.0
    %v1281 = vand.u32 %v112, 4294901760
    %v1282 = vsub.f32 %v112, %v1281
    %v1283 = vand.u32 %v1282, 4294901760
    %v1284 = vsub.f32 %v1282, %v1283
    %v1285 = vand.u32 %v1284, 4294901760
    %1286 = vmatpush1.msra.mxu0 %v1285
    %1287 = vmatprep.subr.mxu0 0.0
    %v1288 = vand.u32 %v113, 4294901760
    %v1289 = vsub.f32 %v113, %v1288
    %v1290 = vand.u32 %v1289, 4294901760
    %v1291 = vsub.f32 %v1289, %v1290
    %v1292 = vand.u32 %v1291, 4294901760
    %1293 = vmatpush1.msra.mxu0 %v1292
    %1294 = vmatprep.subr.mxu0 0.0
    %v1295 = vand.u32 %v114, 4294901760
    %v1296 = vsub.f32 %v114, %v1295
    %v1297 = vand.u32 %v1296, 4294901760
    %v1298 = vsub.f32 %v1296, %v1297
    %v1299 = vand.u32 %v1298, 4294901760
    %1300 = vmatpush1.msra.mxu0 %v1299
    %1301 = vmatprep.subr.mxu0 0.0
    %v1302 = vand.u32 %v115, 4294901760
    %v1303 = vsub.f32 %v115, %v1302
    %v1304 = vand.u32 %v1303, 4294901760
    %v1305 = vsub.f32 %v1303, %v1304
    %v1306 = vand.u32 %v1305, 4294901760
    %1307 = vmatpush1.msra.mxu0 %v1306
    %1308 = vmatprep.subr.mxu0 0.0
    %v1309 = vand.u32 %v116, 4294901760
    %v1310 = vsub.f32 %v116, %v1309
    %v1311 = vand.u32 %v1310, 4294901760
    %v1312 = vsub.f32 %v1310, %v1311
    %v1313 = vand.u32 %v1312, 4294901760
    %1314 = vmatpush1.msra.mxu0 %v1313
    %v1315 = vand.u32 %v52, 4294901760
    %1316 = vmatprep.mubr.f32.mxu0 %v1315
    %v1317 = vand.u32 %v46, 4294901760
    %1318 = vmatmul.mubr.f32.gmra.mrb[0].mxu0 %v1317
    %v1319 = vpop.f32.mrb[0].mxu0
    %v1320 = vadd.f32 %v1088, %v1319
    %v1321 = vpop.f32.mrb[0].mxu0
    %1322 = vdwg.mxu0
    %1323 = vmatprep.subr.mxu0 0.0
    %v1324 = vand.u32 %v85, 4294901760
    %v1325 = vsub.f32 %v85, %v1324
    %1326 = vmatpush1.msra.mxu0 %v1325
    %1327 = vmatprep.subr.mxu0 0.0
    %v1328 = vand.u32 %v86, 4294901760
    %v1329 = vsub.f32 %v86, %v1328
    %1330 = vmatpush1.msra.mxu0 %v1329
    %1331 = vmatprep.subr.mxu0 0.0
    %v1332 = vand.u32 %v87, 4294901760
    %v1333 = vsub.f32 %v87, %v1332
    %1334 = vmatpush1.msra.mxu0 %v1333
    %1335 = vmatprep.subr.mxu0 0.0
    %v1336 = vand.u32 %v88, 4294901760
    %v1337 = vsub.f32 %v88, %v1336
    %1338 = vmatpush1.msra.mxu0 %v1337
    %1339 = vmatprep.subr.mxu0 0.0
    %v1340 = vand.u32 %v89, 4294901760
    %v1341 = vsub.f32 %v89, %v1340
    %1342 = vmatpush1.msra.mxu0 %v1341
    %1343 = vmatprep.subr.mxu0 0.0
    %v1344 = vand.u32 %v90, 4294901760
    %v1345 = vsub.f32 %v90, %v1344
    %1346 = vmatpush1.msra.mxu0 %v1345
    %1347 = vmatprep.subr.mxu0 0.0
    %v1348 = vand.u32 %v91, 4294901760
    %v1349 = vsub.f32 %v91, %v1348
    %1350 = vmatpush1.msra.mxu0 %v1349
    %1351 = vmatprep.subr.mxu0 0.0
    %v1352 = vand.u32 %v92, 4294901760
    %v1353 = vsub.f32 %v92, %v1352
    %1354 = vmatpush1.msra.mxu0 %v1353
    %1355 = vmatprep.subr.mxu0 0.0
    %v1356 = vand.u32 %v93, 4294901760
    %v1357 = vsub.f32 %v93, %v1356
    %1358 = vmatpush1.msra.mxu0 %v1357
    %1359 = vmatprep.subr.mxu0 0.0
    %v1360 = vand.u32 %v94, 4294901760
    %v1361 = vsub.f32 %v94, %v1360
    %1362 = vmatpush1.msra.mxu0 %v1361
    %1363 = vmatprep.subr.mxu0 0.0
    %v1364 = vand.u32 %v95, 4294901760
    %v1365 = vsub.f32 %v95, %v1364
    %1366 = vmatpush1.msra.mxu0 %v1365
    %1367 = vmatprep.subr.mxu0 0.0
    %v1368 = vand.u32 %v96, 4294901760
    %v1369 = vsub.f32 %v96, %v1368
    %1370 = vmatpush1.msra.mxu0 %v1369
    %1371 = vmatprep.subr.mxu0 0.0
    %v1372 = vand.u32 %v97, 4294901760
    %v1373 = vsub.f32 %v97, %v1372
    %1374 = vmatpush1.msra.mxu0 %v1373
    %1375 = vmatprep.subr.mxu0 0.0
    %v1376 = vand.u32 %v98, 4294901760
    %v1377 = vsub.f32 %v98, %v1376
    %1378 = vmatpush1.msra.mxu0 %v1377
    %1379 = vmatprep.subr.mxu0 0.0
    %v1380 = vand.u32 %v99, 4294901760
    %v1381 = vsub.f32 %v99, %v1380
    %1382 = vmatpush1.msra.mxu0 %v1381
    %1383 = vmatprep.subr.mxu0 0.0
    %v1384 = vand.u32 %v100, 4294901760
    %v1385 = vsub.f32 %v100, %v1384
    %1386 = vmatpush1.msra.mxu0 %v1385
    %1387 = vmatprep.subr.mxu0 0.0
    %v1388 = vand.u32 %v101, 4294901760
    %v1389 = vsub.f32 %v101, %v1388
    %1390 = vmatpush1.msra.mxu0 %v1389
    %1391 = vmatprep.subr.mxu0 0.0
    %v1392 = vand.u32 %v102, 4294901760
    %v1393 = vsub.f32 %v102, %v1392
    %1394 = vmatpush1.msra.mxu0 %v1393
    %1395 = vmatprep.subr.mxu0 0.0
    %v1396 = vand.u32 %v103, 4294901760
    %v1397 = vsub.f32 %v103, %v1396
    %1398 = vmatpush1.msra.mxu0 %v1397
    %1399 = vmatprep.subr.mxu0 0.0
    %v1400 = vand.u32 %v104, 4294901760
    %v1401 = vsub.f32 %v104, %v1400
    %1402 = vmatpush1.msra.mxu0 %v1401
    %1403 = vmatprep.subr.mxu0 0.0
    %v1404 = vand.u32 %v105, 4294901760
    %v1405 = vsub.f32 %v105, %v1404
    %1406 = vmatpush1.msra.mxu0 %v1405
    %1407 = vmatprep.subr.mxu0 0.0
    %v1408 = vand.u32 %v106, 4294901760
    %v1409 = vsub.f32 %v106, %v1408
    %1410 = vmatpush1.msra.mxu0 %v1409
    %1411 = vmatprep.subr.mxu0 0.0
    %v1412 = vand.u32 %v107, 4294901760
    %v1413 = vsub.f32 %v107, %v1412
    %1414 = vmatpush1.msra.mxu0 %v1413
    %1415 = vmatprep.subr.mxu0 0.0
    %v1416 = vand.u32 %v108, 4294901760
    %v1417 = vsub.f32 %v108, %v1416
    %1418 = vmatpush1.msra.mxu0 %v1417
    %1419 = vmatprep.subr.mxu0 0.0
    %v1420 = vand.u32 %v109, 4294901760
    %v1421 = vsub.f32 %v109, %v1420
    %1422 = vmatpush1.msra.mxu0 %v1421
    %1423 = vmatprep.subr.mxu0 0.0
    %v1424 = vand.u32 %v110, 4294901760
    %v1425 = vsub.f32 %v110, %v1424
    %1426 = vmatpush1.msra.mxu0 %v1425
    %1427 = vmatprep.subr.mxu0 0.0
    %v1428 = vand.u32 %v111, 4294901760
    %v1429 = vsub.f32 %v111, %v1428
    %1430 = vmatpush1.msra.mxu0 %v1429
    %1431 = vmatprep.subr.mxu0 0.0
    %v1432 = vand.u32 %v112, 4294901760
    %v1433 = vsub.f32 %v112, %v1432
    %1434 = vmatpush1.msra.mxu0 %v1433
    %1435 = vmatprep.subr.mxu0 0.0
    %v1436 = vand.u32 %v113, 4294901760
    %v1437 = vsub.f32 %v113, %v1436
    %1438 = vmatpush1.msra.mxu0 %v1437
    %1439 = vmatprep.subr.mxu0 0.0
    %v1440 = vand.u32 %v114, 4294901760
    %v1441 = vsub.f32 %v114, %v1440
    %1442 = vmatpush1.msra.mxu0 %v1441
    %1443 = vmatprep.subr.mxu0 0.0
    %v1444 = vand.u32 %v115, 4294901760
    %v1445 = vsub.f32 %v115, %v1444
    %1446 = vmatpush1.msra.mxu0 %v1445
    %1447 = vmatprep.subr.mxu0 0.0
    %v1448 = vand.u32 %v116, 4294901760
    %v1449 = vsub.f32 %v116, %v1448
    %1450 = vmatpush1.msra.mxu0 %v1449
    %v1451 = vand.u32 %v52, 4294901760
    %v1452 = vsub.f32 %v52, %v1451
    %1453 = vmatprep.mubr.f32.mxu0 %v1452
    %v1454 = vand.u32 %v46, 4294901760
    %v1455 = vsub.f32 %v46, %v1454
    %1456 = vmatmul.mubr.f32.gmra.mrb[0].mxu0 %v1455
    %v1457 = vpop.f32.mrb[0].mxu0
    %v1458 = vadd.f32 %v1320, %v1457
    %v1459 = vpop.f32.mrb[0].mxu0
    %1460 = vdwg.mxu0
    %1461 = vmatprep.subr.mxu0 0.0
    %v1462 = vand.u32 %v85, 4294901760
    %1463 = vmatpush1.msra.mxu0 %v1462
    %1464 = vmatprep.subr.mxu0 0.0
    %v1465 = vand.u32 %v86, 4294901760
    %1466 = vmatpush1.msra.mxu0 %v1465
    %1467 = vmatprep.subr.mxu0 0.0
    %v1468 = vand.u32 %v87, 4294901760
    %1469 = vmatpush1.msra.mxu0 %v1468
    %1470 = vmatprep.subr.mxu0 0.0
    %v1471 = vand.u32 %v88, 4294901760
    %1472 = vmatpush1.msra.mxu0 %v1471
    %1473 = vmatprep.subr.mxu0 0.0
    %v1474 = vand.u32 %v89, 4294901760
    %1475 = vmatpush1.msra.mxu0 %v1474
    %1476 = vmatprep.subr.mxu0 0.0
    %v1477 = vand.u32 %v90, 4294901760
    %1478 = vmatpush1.msra.mxu0 %v1477
    %1479 = vmatprep.subr.mxu0 0.0
    %v1480 = vand.u32 %v91, 4294901760
    %1481 = vmatpush1.msra.mxu0 %v1480
    %1482 = vmatprep.subr.mxu0 0.0
    %v1483 = vand.u32 %v92, 4294901760
    %1484 = vmatpush1.msra.mxu0 %v1483
    %1485 = vmatprep.subr.mxu0 0.0
    %v1486 = vand.u32 %v93, 4294901760
    %1487 = vmatpush1.msra.mxu0 %v1486
    %1488 = vmatprep.subr.mxu0 0.0
    %v1489 = vand.u32 %v94, 4294901760
    %1490 = vmatpush1.msra.mxu0 %v1489
    %1491 = vmatprep.subr.mxu0 0.0
    %v1492 = vand.u32 %v95, 4294901760
    %1493 = vmatpush1.msra.mxu0 %v1492
    %1494 = vmatprep.subr.mxu0 0.0
    %v1495 = vand.u32 %v96, 4294901760
    %1496 = vmatpush1.msra.mxu0 %v1495
    %1497 = vmatprep.subr.mxu0 0.0
    %v1498 = vand.u32 %v97, 4294901760
    %1499 = vmatpush1.msra.mxu0 %v1498
    %1500 = vmatprep.subr.mxu0 0.0
    %v1501 = vand.u32 %v98, 4294901760
    %1502 = vmatpush1.msra.mxu0 %v1501
    %1503 = vmatprep.subr.mxu0 0.0
    %v1504 = vand.u32 %v99, 4294901760
    %1505 = vmatpush1.msra.mxu0 %v1504
    %1506 = vmatprep.subr.mxu0 0.0
    %v1507 = vand.u32 %v100, 4294901760
    %1508 = vmatpush1.msra.mxu0 %v1507
    %1509 = vmatprep.subr.mxu0 0.0
    %v1510 = vand.u32 %v101, 4294901760
    %1511 = vmatpush1.msra.mxu0 %v1510
    %1512 = vmatprep.subr.mxu0 0.0
    %v1513 = vand.u32 %v102, 4294901760
    %1514 = vmatpush1.msra.mxu0 %v1513
    %1515 = vmatprep.subr.mxu0 0.0
    %v1516 = vand.u32 %v103, 4294901760
    %1517 = vmatpush1.msra.mxu0 %v1516
    %1518 = vmatprep.subr.mxu0 0.0
    %v1519 = vand.u32 %v104, 4294901760
    %1520 = vmatpush1.msra.mxu0 %v1519
    %1521 = vmatprep.subr.mxu0 0.0
    %v1522 = vand.u32 %v105, 4294901760
    %1523 = vmatpush1.msra.mxu0 %v1522
    %1524 = vmatprep.subr.mxu0 0.0
    %v1525 = vand.u32 %v106, 4294901760
    %1526 = vmatpush1.msra.mxu0 %v1525
    %1527 = vmatprep.subr.mxu0 0.0
    %v1528 = vand.u32 %v107, 4294901760
    %1529 = vmatpush1.msra.mxu0 %v1528
    %1530 = vmatprep.subr.mxu0 0.0
    %v1531 = vand.u32 %v108, 4294901760
    %1532 = vmatpush1.msra.mxu0 %v1531
    %1533 = vmatprep.subr.mxu0 0.0
    %v1534 = vand.u32 %v109, 4294901760
    %1535 = vmatpush1.msra.mxu0 %v1534
    %1536 = vmatprep.subr.mxu0 0.0
    %v1537 = vand.u32 %v110, 4294901760
    %1538 = vmatpush1.msra.mxu0 %v1537
    %1539 = vmatprep.subr.mxu0 0.0
    %v1540 = vand.u32 %v111, 4294901760
    %1541 = vmatpush1.msra.mxu0 %v1540
    %1542 = vmatprep.subr.mxu0 0.0
    %v1543 = vand.u32 %v112, 4294901760
    %1544 = vmatpush1.msra.mxu0 %v1543
    %1545 = vmatprep.subr.mxu0 0.0
    %v1546 = vand.u32 %v113, 4294901760
    %1547 = vmatpush1.msra.mxu0 %v1546
    %1548 = vmatprep.subr.mxu0 0.0
    %v1549 = vand.u32 %v114, 4294901760
    %1550 = vmatpush1.msra.mxu0 %v1549
    %1551 = vmatprep.subr.mxu0 0.0
    %v1552 = vand.u32 %v115, 4294901760
    %1553 = vmatpush1.msra.mxu0 %v1552
    %1554 = vmatprep.subr.mxu0 0.0
    %v1555 = vand.u32 %v116, 4294901760
    %1556 = vmatpush1.msra.mxu0 %v1555
    %v1557 = vand.u32 %v52, 4294901760
    %v1558 = vsub.f32 %v52, %v1557
    %v1559 = vand.u32 %v1558, 4294901760
    %1560 = vmatprep.mubr.f32.mxu0 %v1559
    %v1561 = vand.u32 %v46, 4294901760
    %v1562 = vsub.f32 %v46, %v1561
    %v1563 = vand.u32 %v1562, 4294901760
    %1564 = vmatmul.mubr.f32.gmra.mrb[0].mxu0 %v1563
    %v1565 = vpop.f32.mrb[0].mxu0
    %v1566 = vadd.f32 %v1458, %v1565
    %v1567 = vpop.f32.mrb[0].mxu0
    %1568 = vdwg.mxu0
    %1569 = vmatprep.subr.mxu0 0.0
    %v1570 = vand.u32 %v85, 4294901760
    %v1571 = vsub.f32 %v85, %v1570
    %v1572 = vand.u32 %v1571, 4294901760
    %1573 = vmatpush1.msra.mxu0 %v1572
    %1574 = vmatprep.subr.mxu0 0.0
    %v1575 = vand.u32 %v86, 4294901760
    %v1576 = vsub.f32 %v86, %v1575
    %v1577 = vand.u32 %v1576, 4294901760
    %1578 = vmatpush1.msra.mxu0 %v1577
    %1579 = vmatprep.subr.mxu0 0.0
    %v1580 = vand.u32 %v87, 4294901760
    %v1581 = vsub.f32 %v87, %v1580
    %v1582 = vand.u32 %v1581, 4294901760
    %1583 = vmatpush1.msra.mxu0 %v1582
    %1584 = vmatprep.subr.mxu0 0.0
    %v1585 = vand.u32 %v88, 4294901760
    %v1586 = vsub.f32 %v88, %v1585
    %v1587 = vand.u32 %v1586, 4294901760
    %1588 = vmatpush1.msra.mxu0 %v1587
    %1589 = vmatprep.subr.mxu0 0.0
    %v1590 = vand.u32 %v89, 4294901760
    %v1591 = vsub.f32 %v89, %v1590
    %v1592 = vand.u32 %v1591, 4294901760
    %1593 = vmatpush1.msra.mxu0 %v1592
    %1594 = vmatprep.subr.mxu0 0.0
    %v1595 = vand.u32 %v90, 4294901760
    %v1596 = vsub.f32 %v90, %v1595
    %v1597 = vand.u32 %v1596, 4294901760
    %1598 = vmatpush1.msra.mxu0 %v1597
    %1599 = vmatprep.subr.mxu0 0.0
    %v1600 = vand.u32 %v91, 4294901760
    %v1601 = vsub.f32 %v91, %v1600
    %v1602 = vand.u32 %v1601, 4294901760
    %1603 = vmatpush1.msra.mxu0 %v1602
    %1604 = vmatprep.subr.mxu0 0.0
    %v1605 = vand.u32 %v92, 4294901760
    %v1606 = vsub.f32 %v92, %v1605
    %v1607 = vand.u32 %v1606, 4294901760
    %1608 = vmatpush1.msra.mxu0 %v1607
    %1609 = vmatprep.subr.mxu0 0.0
    %v1610 = vand.u32 %v93, 4294901760
    %v1611 = vsub.f32 %v93, %v1610
    %v1612 = vand.u32 %v1611, 4294901760
    %1613 = vmatpush1.msra.mxu0 %v1612
    %1614 = vmatprep.subr.mxu0 0.0
    %v1615 = vand.u32 %v94, 4294901760
    %v1616 = vsub.f32 %v94, %v1615
    %v1617 = vand.u32 %v1616, 4294901760
    %1618 = vmatpush1.msra.mxu0 %v1617
    %1619 = vmatprep.subr.mxu0 0.0
    %v1620 = vand.u32 %v95, 4294901760
    %v1621 = vsub.f32 %v95, %v1620
    %v1622 = vand.u32 %v1621, 4294901760
    %1623 = vmatpush1.msra.mxu0 %v1622
    %1624 = vmatprep.subr.mxu0 0.0
    %v1625 = vand.u32 %v96, 4294901760
    %v1626 = vsub.f32 %v96, %v1625
    %v1627 = vand.u32 %v1626, 4294901760
    %1628 = vmatpush1.msra.mxu0 %v1627
    %1629 = vmatprep.subr.mxu0 0.0
    %v1630 = vand.u32 %v97, 4294901760
    %v1631 = vsub.f32 %v97, %v1630
    %v1632 = vand.u32 %v1631, 4294901760
    %1633 = vmatpush1.msra.mxu0 %v1632
    %1634 = vmatprep.subr.mxu0 0.0
    %v1635 = vand.u32 %v98, 4294901760
    %v1636 = vsub.f32 %v98, %v1635
    %v1637 = vand.u32 %v1636, 4294901760
    %1638 = vmatpush1.msra.mxu0 %v1637
    %1639 = vmatprep.subr.mxu0 0.0
    %v1640 = vand.u32 %v99, 4294901760
    %v1641 = vsub.f32 %v99, %v1640
    %v1642 = vand.u32 %v1641, 4294901760
    %1643 = vmatpush1.msra.mxu0 %v1642
    %1644 = vmatprep.subr.mxu0 0.0
    %v1645 = vand.u32 %v100, 4294901760
    %v1646 = vsub.f32 %v100, %v1645
    %v1647 = vand.u32 %v1646, 4294901760
    %1648 = vmatpush1.msra.mxu0 %v1647
    %1649 = vmatprep.subr.mxu0 0.0
    %v1650 = vand.u32 %v101, 4294901760
    %v1651 = vsub.f32 %v101, %v1650
    %v1652 = vand.u32 %v1651, 4294901760
    %1653 = vmatpush1.msra.mxu0 %v1652
    %1654 = vmatprep.subr.mxu0 0.0
    %v1655 = vand.u32 %v102, 4294901760
    %v1656 = vsub.f32 %v102, %v1655
    %v1657 = vand.u32 %v1656, 4294901760
    %1658 = vmatpush1.msra.mxu0 %v1657
    %1659 = vmatprep.subr.mxu0 0.0
    %v1660 = vand.u32 %v103, 4294901760
    %v1661 = vsub.f32 %v103, %v1660
    %v1662 = vand.u32 %v1661, 4294901760
    %1663 = vmatpush1.msra.mxu0 %v1662
    %1664 = vmatprep.subr.mxu0 0.0
    %v1665 = vand.u32 %v104, 4294901760
    %v1666 = vsub.f32 %v104, %v1665
    %v1667 = vand.u32 %v1666, 4294901760
    %1668 = vmatpush1.msra.mxu0 %v1667
    %1669 = vmatprep.subr.mxu0 0.0
    %v1670 = vand.u32 %v105, 4294901760
    %v1671 = vsub.f32 %v105, %v1670
    %v1672 = vand.u32 %v1671, 4294901760
    %1673 = vmatpush1.msra.mxu0 %v1672
    %1674 = vmatprep.subr.mxu0 0.0
    %v1675 = vand.u32 %v106, 4294901760
    %v1676 = vsub.f32 %v106, %v1675
    %v1677 = vand.u32 %v1676, 4294901760
    %1678 = vmatpush1.msra.mxu0 %v1677
    %1679 = vmatprep.subr.mxu0 0.0
    %v1680 = vand.u32 %v107, 4294901760
    %v1681 = vsub.f32 %v107, %v1680
    %v1682 = vand.u32 %v1681, 4294901760
    %1683 = vmatpush1.msra.mxu0 %v1682
    %1684 = vmatprep.subr.mxu0 0.0
    %v1685 = vand.u32 %v108, 4294901760
    %v1686 = vsub.f32 %v108, %v1685
    %v1687 = vand.u32 %v1686, 4294901760
    %1688 = vmatpush1.msra.mxu0 %v1687
    %1689 = vmatprep.subr.mxu0 0.0
    %v1690 = vand.u32 %v109, 4294901760
    %v1691 = vsub.f32 %v109, %v1690
    %v1692 = vand.u32 %v1691, 4294901760
    %1693 = vmatpush1.msra.mxu0 %v1692
    %1694 = vmatprep.subr.mxu0 0.0
    %v1695 = vand.u32 %v110, 4294901760
    %v1696 = vsub.f32 %v110, %v1695
    %v1697 = vand.u32 %v1696, 4294901760
    %1698 = vmatpush1.msra.mxu0 %v1697
    %1699 = vmatprep.subr.mxu0 0.0
    %v1700 = vand.u32 %v111, 4294901760
    %v1701 = vsub.f32 %v111, %v1700
    %v1702 = vand.u32 %v1701, 4294901760
    %1703 = vmatpush1.msra.mxu0 %v1702
    %1704 = vmatprep.subr.mxu0 0.0
    %v1705 = vand.u32 %v112, 4294901760
    %v1706 = vsub.f32 %v112, %v1705
    %v1707 = vand.u32 %v1706, 4294901760
    %1708 = vmatpush1.msra.mxu0 %v1707
    %1709 = vmatprep.subr.mxu0 0.0
    %v1710 = vand.u32 %v113, 4294901760
    %v1711 = vsub.f32 %v113, %v1710
    %v1712 = vand.u32 %v1711, 4294901760
    %1713 = vmatpush1.msra.mxu0 %v1712
    %1714 = vmatprep.subr.mxu0 0.0
    %v1715 = vand.u32 %v114, 4294901760
    %v1716 = vsub.f32 %v114, %v1715
    %v1717 = vand.u32 %v1716, 4294901760
    %1718 = vmatpush1.msra.mxu0 %v1717
    %1719 = vmatprep.subr.mxu0 0.0
    %v1720 = vand.u32 %v115, 4294901760
    %v1721 = vsub.f32 %v115, %v1720
    %v1722 = vand.u32 %v1721, 4294901760
    %1723 = vmatpush1.msra.mxu0 %v1722
    %1724 = vmatprep.subr.mxu0 0.0
    %v1725 = vand.u32 %v116, 4294901760
    %v1726 = vsub.f32 %v116, %v1725
    %v1727 = vand.u32 %v1726, 4294901760
    %1728 = vmatpush1.msra.mxu0 %v1727
    %v1729 = vand.u32 %v52, 4294901760
    %1730 = vmatprep.mubr.f32.mxu0 %v1729
    %v1731 = vand.u32 %v46, 4294901760
    %1732 = vmatmul.mubr.f32.gmra.mrb[0].mxu0 %v1731
    %v1733 = vpop.f32.mrb[0].mxu0
    %v1734 = vadd.f32 %v1566, %v1733
    %v1735 = vpop.f32.mrb[0].mxu0
    %1736 = vdwg.mxu0
    %1737 = vmatprep.subr.mxu0 0.0
    %v1738 = vand.u32 %v85, 4294901760
    %1739 = vmatpush1.msra.mxu0 %v1738
    %1740 = vmatprep.subr.mxu0 0.0
    %v1741 = vand.u32 %v86, 4294901760
    %1742 = vmatpush1.msra.mxu0 %v1741
    %1743 = vmatprep.subr.mxu0 0.0
    %v1744 = vand.u32 %v87, 4294901760
    %1745 = vmatpush1.msra.mxu0 %v1744
    %1746 = vmatprep.subr.mxu0 0.0
    %v1747 = vand.u32 %v88, 4294901760
    %1748 = vmatpush1.msra.mxu0 %v1747
    %1749 = vmatprep.subr.mxu0 0.0
    %v1750 = vand.u32 %v89, 4294901760
    %1751 = vmatpush1.msra.mxu0 %v1750
    %1752 = vmatprep.subr.mxu0 0.0
    %v1753 = vand.u32 %v90, 4294901760
    %1754 = vmatpush1.msra.mxu0 %v1753
    %1755 = vmatprep.subr.mxu0 0.0
    %v1756 = vand.u32 %v91, 4294901760
    %1757 = vmatpush1.msra.mxu0 %v1756
    %1758 = vmatprep.subr.mxu0 0.0
    %v1759 = vand.u32 %v92, 4294901760
    %1760 = vmatpush1.msra.mxu0 %v1759
    %1761 = vmatprep.subr.mxu0 0.0
    %v1762 = vand.u32 %v93, 4294901760
    %1763 = vmatpush1.msra.mxu0 %v1762
    %1764 = vmatprep.subr.mxu0 0.0
    %v1765 = vand.u32 %v94, 4294901760
    %1766 = vmatpush1.msra.mxu0 %v1765
    %1767 = vmatprep.subr.mxu0 0.0
    %v1768 = vand.u32 %v95, 4294901760
    %1769 = vmatpush1.msra.mxu0 %v1768
    %1770 = vmatprep.subr.mxu0 0.0
    %v1771 = vand.u32 %v96, 4294901760
    %1772 = vmatpush1.msra.mxu0 %v1771
    %1773 = vmatprep.subr.mxu0 0.0
    %v1774 = vand.u32 %v97, 4294901760
    %1775 = vmatpush1.msra.mxu0 %v1774
    %1776 = vmatprep.subr.mxu0 0.0
    %v1777 = vand.u32 %v98, 4294901760
    %1778 = vmatpush1.msra.mxu0 %v1777
    %1779 = vmatprep.subr.mxu0 0.0
    %v1780 = vand.u32 %v99, 4294901760
    %1781 = vmatpush1.msra.mxu0 %v1780
    %1782 = vmatprep.subr.mxu0 0.0
    %v1783 = vand.u32 %v100, 4294901760
    %1784 = vmatpush1.msra.mxu0 %v1783
    %1785 = vmatprep.subr.mxu0 0.0
    %v1786 = vand.u32 %v101, 4294901760
    %1787 = vmatpush1.msra.mxu0 %v1786
    %1788 = vmatprep.subr.mxu0 0.0
    %v1789 = vand.u32 %v102, 4294901760
    %1790 = vmatpush1.msra.mxu0 %v1789
    %1791 = vmatprep.subr.mxu0 0.0
    %v1792 = vand.u32 %v103, 4294901760
    %1793 = vmatpush1.msra.mxu0 %v1792
    %1794 = vmatprep.subr.mxu0 0.0
    %v1795 = vand.u32 %v104, 4294901760
    %1796 = vmatpush1.msra.mxu0 %v1795
    %1797 = vmatprep.subr.mxu0 0.0
    %v1798 = vand.u32 %v105, 4294901760
    %1799 = vmatpush1.msra.mxu0 %v1798
    %1800 = vmatprep.subr.mxu0 0.0
    %v1801 = vand.u32 %v106, 4294901760
    %1802 = vmatpush1.msra.mxu0 %v1801
    %1803 = vmatprep.subr.mxu0 0.0
    %v1804 = vand.u32 %v107, 4294901760
    %1805 = vmatpush1.msra.mxu0 %v1804
    %1806 = vmatprep.subr.mxu0 0.0
    %v1807 = vand.u32 %v108, 4294901760
    %1808 = vmatpush1.msra.mxu0 %v1807
    %1809 = vmatprep.subr.mxu0 0.0
    %v1810 = vand.u32 %v109, 4294901760
    %1811 = vmatpush1.msra.mxu0 %v1810
    %1812 = vmatprep.subr.mxu0 0.0
    %v1813 = vand.u32 %v110, 4294901760
    %1814 = vmatpush1.msra.mxu0 %v1813
    %1815 = vmatprep.subr.mxu0 0.0
    %v1816 = vand.u32 %v111, 4294901760
    %1817 = vmatpush1.msra.mxu0 %v1816
    %1818 = vmatprep.subr.mxu0 0.0
    %v1819 = vand.u32 %v112, 4294901760
    %1820 = vmatpush1.msra.mxu0 %v1819
    %1821 = vmatprep.subr.mxu0 0.0
    %v1822 = vand.u32 %v113, 4294901760
    %1823 = vmatpush1.msra.mxu0 %v1822
    %1824 = vmatprep.subr.mxu0 0.0
    %v1825 = vand.u32 %v114, 4294901760
    %1826 = vmatpush1.msra.mxu0 %v1825
    %1827 = vmatprep.subr.mxu0 0.0
    %v1828 = vand.u32 %v115, 4294901760
    %1829 = vmatpush1.msra.mxu0 %v1828
    %1830 = vmatprep.subr.mxu0 0.0
    %v1831 = vand.u32 %v116, 4294901760
    %1832 = vmatpush1.msra.mxu0 %v1831
    %v1833 = vand.u32 %v52, 4294901760
    %1834 = vmatprep.mubr.f32.mxu0 %v1833
    %v1835 = vand.u32 %v46, 4294901760
    %1836 = vmatmul.mubr.f32.gmra.mrb[0].mxu0 %v1835
    %v1837 = vpop.f32.mrb[0].mxu0
    %v1838 = vadd.f32 %v1734, %v1837
    %v1839 = vpop.f32.mrb[0].mxu0
    %1840 = vdwg.mxu0
    %1841 = vst [vmem:[#allocation5] sm:$0xff] %v1838
    // Predicated region
    $region14: #{tpu_custom_call.1} parent=1 // pred_check
      _
    $region15: #{tpu_custom_call.1} parent=1 // pred_check_branch
      %1843 = sbr.rel (0) target = $region17
    $region16: #{tpu_custom_call.1} parent=1 // pred_region
      %s1845 = ssub.s32 128, 128
      %1846 = vsyncadd [#allocation4], %s1845
      %s1848 = sshll.u32 [#allocation5], 4
      %s1849 = int_to_ptr.vmem [resolvable:$true] %s1848
      %1851 = dma.vmem_to_hbm [thread:$0]  %s1849, 128, %s2, [#allocation4]
    $region17: #{tpu_custom_call.1} parent=1 // pred_fallthru
      _
    // Predicated region
    $region18: #{tpu_custom_call.1} parent=1 // pred_check
      _
    $region19: #{tpu_custom_call.1} parent=1 // pred_check_branch
      %1853 = sbr.rel (0) target = $region21
    $region20: #{tpu_custom_call.1} parent=1 // pred_region
      %1854 = dma.done [#allocation4], 128
    $region21: #{tpu_custom_call.1} parent=1 // pred_fallthru
      _
    %1855 = vsyncpa [#allocation3], 1
    %1856 = vsyncpa [#allocation4], 1

</llo_original>
